<compile_context>
chip_gen: v7x
topology: tpu7x:2x2x1
jax: 0.10.0
libtpu: 0.0.40
codegen_flags: <defaults>
</compile_context>

<pallas_src>
import functools

import jax
import jax.numpy as jnp
from jax.experimental import pallas as pl
from jax.experimental.pallas import tpu as pltpu

_LANE = 128
_FALLBACK_VMEM_BUDGET = 48 * 1024 * 1024   # safe on every TPU generation


def _round_up(n, m):
    return (n + m - 1) // m * m


def _vmem_budget():
    """~75% of per-core VMEM (≈48 MiB on v7x, ≈96 MiB on v5e/v6e)."""
    try:
        cap = int(pltpu.get_tpu_info().vmem_capacity_bytes)
        budget = (cap * 3) // 4
    except Exception:  # noqa: BLE001 - fall back conservatively
        budget = _FALLBACK_VMEM_BUDGET
    return max(_FALLBACK_VMEM_BUDGET, min(budget, 96 * 1024 * 1024))


def _select_tiles(B, f_in_p, f_out_p, in_item, out_item, budget,
                  x_resident, acc_in_out):
    """Largest lane-dense (tn, tk) whose double-buffered working set fits."""
    x_fixed = 2 * B * f_in_p * in_item  # conservative: count 2 buffers
    for tn in (1024, 512, 256, 128):
        if f_out_p % tn:
            continue
        # Prefer >=2 output tiles so both v7x TensorCores get work.
        if f_out_p // tn < 2 and f_out_p > _LANE:
            continue
        for tk in (512, 256, 128):
            if f_in_p % tk:
                continue
            x_bytes = x_fixed if x_resident else 2 * B * tk * in_item
            w_bytes = 2 * tk * tn * in_item
            o_bytes = 2 * B * tn * out_item
            a_bytes = 0 if acc_in_out else B * tn * 4
            if x_bytes + w_bytes + o_bytes + a_bytes <= (budget * 4) // 5:
                return tn, tk
    return _LANE, _LANE   # minimum lane-dense fallback (valid after padding)


def _linear_bn_kernel(x_ref, w_ref, g_ref, beta_ref, o_ref, *scratch,
                      apply_relu, eps, x_resident, tk, acc_in_out, cast_bf16):
    """grid=(N_tiles, K_tiles). Accumulate x@W over K; BN(+ReLU) at k==last."""
    k = pl.program_id(1)
    acc_ref = o_ref if acc_in_out else scratch[0]

    @pl.when(k == 0)
    def _init():
        acc_ref[...] = jnp.zeros_like(acc_ref)

    if x_resident:
        x_blk = x_ref[:, pl.ds(pl.multiple_of(k * tk, tk), tk)]
    else:
        x_blk = x_ref[...]
    w_blk = w_ref[...]
    if cast_bf16:
        x_blk = x_blk.astype(jnp.bfloat16)
        w_blk = w_blk.astype(jnp.bfloat16)
    if x_blk.dtype == jnp.float32:
        prec = jax.lax.Precision.HIGHEST    # exact f32 matmul semantics
    else:
        prec = jax.lax.Precision.DEFAULT
    acc_ref[...] += jnp.dot(x_blk, w_blk,
                            preferred_element_type=jnp.float32,
                            precision=prec)

    @pl.when(k == pl.num_programs(1) - 1)
    def _finalize():
        y = acc_ref[...]                                   # (B, tn) f32
        inv_b = 1.0 / y.shape[0]
        # One-pass batch statistics with a per-feature pivot (row 0) to limit
        # E[x^2]-E[x]^2 cancellation.  Biased variance == PyTorch training BN.
        pivot = y[0:1, :]
        yc = y - pivot
        mean_c = jnp.sum(yc, axis=0, keepdims=True) * inv_b
        var = jnp.maximum(
            jnp.sum(yc * yc, axis=0, keepdims=True) * inv_b - mean_c * mean_c,
            0.0)
        mean = mean_c + pivot
        # Fold gamma / rsqrt / beta into a per-feature scale & shift.
        scale = g_ref[...].astype(jnp.float32) * jax.lax.rsqrt(var + eps)
        shift = beta_ref[...].astype(jnp.float32) - mean * scale
        out = y * scale + shift
        if apply_relu:
            out = jnp.maximum(out, 0.0)
        o_ref[...] = out.astype(o_ref.dtype)


def _fused_layer(x, w, gamma, beta, *, apply_relu, eps=1e-5, mxu_bf16=False):
    """One Linear (bias-free) + training-mode BatchNorm1d (+ReLU) fused call.

    The Linear bias is intentionally omitted: training-mode BN subtracts the
    batch mean, which cancels any per-feature bias exactly.
    """
    B, f_in = x.shape
    f_in_w, f_out = w.shape
    assert f_in == f_in_w, (f_in, f_in_w)
    # NOTE: for production MXU utilisation B should be >= 256 (and a multiple
    # of the sublane pack: 8 for f32 / 16 for bf16); tiny B starves the MXU.

    # Pad feature dims to lane multiples so every tile is lane-dense; padded
    # output features are sliced off below.  Batch is never padded.
    f_in_p = _round_up(f_in, _LANE)
    f_out_p = _round_up(f_out, _LANE)
    if f_in_p != f_in:
        x = jnp.pad(x, ((0, 0), (0, f_in_p - f_in)))
        w = jnp.pad(w, ((0, f_in_p - f_in), (0, 0)))
    if f_out_p != f_out:
        w = jnp.pad(w, ((0, 0), (0, f_out_p - f_out)))
        gamma = jnp.pad(gamma, (0, f_out_p - f_out))
        beta = jnp.pad(beta, (0, f_out_p - f_out))

    out_dtype = x.dtype
    in_item = jnp.dtype(x.dtype).itemsize
    out_item = jnp.dtype(out_dtype).itemsize

    budget = _vmem_budget()
    acc_in_out = out_dtype == jnp.float32      # accumulate directly in o_ref
    x_resident = (B * f_in_p * in_item) <= budget // 4
    tn, tk = _select_tiles(B, f_in_p, f_out_p, in_item, out_item, budget,
                           x_resident, acc_in_out)
    n_tiles = f_out_p // tn
    k_tiles = f_in_p // tk

    g2 = gamma.reshape(1, f_out_p)
    beta2 = beta.reshape(1, f_out_p)

    cast_bf16 = bool(mxu_bf16) and x.dtype == jnp.float32
    kernel = functools.partial(
        _linear_bn_kernel, apply_relu=apply_relu, eps=eps,
        x_resident=x_resident, tk=tk, acc_in_out=acc_in_out,
        cast_bf16=cast_bf16)

    if x_resident:
        # Constant index_map -> activation panel DMA'd from HBM exactly once.
        x_spec = pl.BlockSpec((B, f_in_p), lambda j, k: (0, 0))
        x_read_bytes = B * f_in_p * in_item
    else:
        x_spec = pl.BlockSpec((B, tk), lambda j, k: (0, k))
        x_read_bytes = n_tiles * B * f_in_p * in_item   # re-read per j tile

    # TODO(synk): on v5e with small B sweep pipeline_mode=pl.Buffered(3) on the
    # weight spec (weight-stream-bound regime); keep depth 2 on v7x.
    in_specs = [
        x_spec,
        pl.BlockSpec((tk, tn), lambda j, k: (k, j)),   # weights
        pl.BlockSpec((1, tn), lambda j, k: (0, j)),    # gamma
        pl.BlockSpec((1, tn), lambda j, k: (0, j)),    # beta
    ]
    scratch_shapes = [] if acc_in_out else [pltpu.VMEM((B, tn), jnp.float32)]

    cost = pl.CostEstimate(
        flops=2 * B * f_in_p * f_out_p,
        transcendentals=0,
        bytes_accessed=(x_read_bytes
                        + f_in_p * f_out_p * in_item           # weights (once)
                        + 2 * f_out_p * in_item                # gamma + beta
                        + B * f_out_p * out_item),             # output write
    )

    out_p = pl.pallas_call(
        kernel,
        out_shape=jax.ShapeDtypeStruct((B, f_out_p), out_dtype),
        grid_spec=pltpu.PrefetchScalarGridSpec(
            num_scalar_prefetch=0,
            grid=(n_tiles, k_tiles),
            in_specs=in_specs,
            out_specs=pl.BlockSpec((B, tn), lambda j, k: (0, j)),
            scratch_shapes=scratch_shapes,
        ),
        compiler_params=pltpu.CompilerParams(
            dimension_semantics=("parallel", "arbitrary"),
            vmem_limit_bytes=int(budget),
        ),
        cost_estimate=cost,
    )(x, w, g2, beta2)

    return out_p if f_out_p == f_out else out_p[:, :f_out]


def _init_linear(key, f_in, f_out, dtype=jnp.float32):
    """PyTorch-style init: U(-1/sqrt(fan_in), 1/sqrt(fan_in))."""
    kw, kb = jax.random.split(key)
    bound = 1.0 / jnp.sqrt(jnp.float32(f_in))
    # Stored as (F_in, F_out) == transpose of PyTorch's (F_out, F_in).
    w = jax.random.uniform(kw, (f_in, f_out), dtype, -bound, bound)
    b = jax.random.uniform(kb, (f_out,), dtype, -bound, bound)
    return w, b


def make_projector_params(key, in_dim, hidden_dim=2048, out_dim=256,
                          dtype=jnp.float32):
    k1, k2, k3 = jax.random.split(key, 3)
    params = {}
    params["w1"], params["b1"] = _init_linear(k1, in_dim, hidden_dim, dtype)
    params["g1"] = jnp.ones((hidden_dim,), dtype)
    params["beta1"] = jnp.zeros((hidden_dim,), dtype)
    params["w2"], params["b2"] = _init_linear(k2, hidden_dim, hidden_dim, dtype)
    params["g2"] = jnp.ones((hidden_dim,), dtype)
    params["beta2"] = jnp.zeros((hidden_dim,), dtype)
    params["w3"], params["b3"] = _init_linear(k3, hidden_dim, out_dim, dtype)
    params["g3"] = jnp.ones((out_dim,), dtype)
    params["beta3"] = jnp.zeros((out_dim,), dtype)
    return params


def _forward(params, x, mxu_bf16=False):
    # Linear biases (b1/b2/b3) are carried in params for PyTorch parity but
    # are NOT used: training-mode BN cancels them exactly.
    h = _fused_layer(x, params["w1"], params["g1"], params["beta1"],
                     apply_relu=True, mxu_bf16=mxu_bf16)
    h = _fused_layer(h, params["w2"], params["g2"], params["beta2"],
                     apply_relu=True, mxu_bf16=mxu_bf16)
    return _fused_layer(h, params["w3"], params["g3"], params["beta3"],
                        apply_relu=False, mxu_bf16=mxu_bf16)


projector_forward = jax.jit(_forward, static_argnames=("mxu_bf16",))


def projector_reference(params, x, eps=1e-5):
    """Pure-JAX reference (two-pass BN, bias included) for sanity checking."""
    def layer(h, w, b, g, beta, relu):
        y = h.astype(jnp.float32) @ w.astype(jnp.float32) + b.astype(jnp.float32)
        mean = jnp.mean(y, axis=0, keepdims=True)
        var = jnp.mean((y - mean) ** 2, axis=0, keepdims=True)
        y = (y - mean) * jax.lax.rsqrt(var + eps) * g.astype(jnp.float32) \
            + beta.astype(jnp.float32)
        return jnp.maximum(y, 0.0) if relu else y

    h = layer(x, params["w1"], params["b1"], params["g1"], params["beta1"], True)
    h = layer(h, params["w2"], params["b2"], params["g2"], params["beta2"], True)
    return layer(h, params["w3"], params["b3"], params["g3"], params["beta3"], False)


if __name__ == "__main__":
    key = jax.random.PRNGKey(0)
    k_params, k_x, k_params2, k_x2 = jax.random.split(key, 4)

    # --- Small smoke test (ragged dims -> exercises 128-padding path) -------
    B, IN_DIM, HIDDEN_DIM, OUT_DIM = 8, 32, 64, 32
    params = make_projector_params(k_params, IN_DIM, HIDDEN_DIM, OUT_DIM)
    x = jax.random.normal(k_x, (B, IN_DIM), jnp.float32)
    out = jax.block_until_ready(projector_forward(params, x))
    ref = projector_reference(params, x)
    assert out.shape == (B, OUT_DIM), out.shape
    assert bool(jnp.allclose(out, ref, atol=1e-3, rtol=1e-3)), "small mismatch"

    # --- Tiled test: N-tiling (out=256 -> 2x128), K-tiling, resident x ------
    B2, IN2, HID2, OUT2 = 32, 384, 512, 256
    params2 = make_projector_params(k_params2, IN2, HID2, OUT2)
    x2 = jax.random.normal(k_x2, (B2, IN2), jnp.float32)
    out2 = jax.block_until_ready(projector_forward(params2, x2))
    ref2 = projector_reference(params2, x2)
    assert out2.shape == (B2, OUT2), out2.shape
    assert bool(jnp.allclose(out2, ref2, atol=2e-3, rtol=2e-3)), "tiled mismatch"

    # --- f32 params with bf16 MXU operands (fast path): loose check ---------
    out_mxu = jax.block_until_ready(projector_forward(params2, x2, mxu_bf16=True))
    assert out_mxu.shape == (B2, OUT2)
    assert bool(jnp.all(jnp.isfinite(out_mxu)))
    assert float(jnp.max(jnp.abs(out_mxu - ref2))) < 0.5, "bf16-MXU path off"

    # --- bf16 end-to-end (recommended production dtype) ---------------------
    params_bf16 = jax.tree_util.tree_map(lambda p: p.astype(jnp.bfloat16), params2)
    x_bf16 = x2.astype(jnp.bfloat16)
    out_bf16 = jax.block_until_ready(projector_forward(params_bf16, x_bf16))
    assert out_bf16.shape == (B2, OUT2)
    assert out_bf16.dtype == jnp.bfloat16
    assert bool(jnp.all(jnp.isfinite(out_bf16.astype(jnp.float32))))

    print("KERNEL_OK")
</pallas_src>

<mosaic_0001>
module attributes {stable_mosaic.version = 11 : i64} {
  func.func @_linear_bn_kernel(%arg0: i32, %arg1: i32, %arg2: memref<8x128xf32, #tpu.memory_space<vmem>>, %arg3: memref<128x128xf32, #tpu.memory_space<vmem>>, %arg4: memref<1x128xf32, #tpu.memory_space<vmem>>, %arg5: memref<1x128xf32, #tpu.memory_space<vmem>>, %arg6: memref<8x128xf32, #tpu.memory_space<vmem>>) attributes {dimension_semantics = [#tpu.dimension_semantics<parallel>, #tpu.dimension_semantics<arbitrary>], iteration_bounds = array<i64: 1, 1>, scalar_prefetch = 0 : i64, scratch_operands = 0 : i64, tpu.core_type = #tpu.core_type<tc>, window_params = [{pipeline_mode = #tpu.pipeline_mode<synchronous>, transform_indices = @transform_0, window_bounds = array<i64: 8, 128>}, {transform_indices = @transform_1, window_bounds = array<i64: 128, 128>}, {transform_indices = @transform_2, window_bounds = array<i64: 1, 128>}, {transform_indices = @transform_3, window_bounds = array<i64: 1, 128>}, {transform_indices = @transform_4, window_bounds = array<i64: 8, 128>}]} {
    %c0_i32 = arith.constant 0 : i32
    %0 = arith.cmpi eq, %arg1, %c0_i32 : i32
    %1 = arith.extui %0 : i1 to i32
    %c0_i32_0 = arith.constant 0 : i32
    %2 = arith.cmpi ne, %1, %c0_i32_0 : i32
    scf.if %2 {
      %cst_9 = arith.constant 0.000000e+00 : f32
      %15 = vector.broadcast %cst_9 : f32 to vector<8x128xf32>
      %c0_10 = arith.constant 0 : index
      %c0_11 = arith.constant 0 : index
      %16 = vector.load %arg6[%c0_10, %c0_11] : memref<8x128xf32, #tpu.memory_space<vmem>>, vector<8x128xf32>
      tpu.vector_store %arg6[%c0_10, %c0_11], %15 {strides = array<i32>} : memref<8x128xf32, #tpu.memory_space<vmem>>, vector<8x128xf32>,
    } else {
    }
    %c128_i32 = arith.constant 128 : i32
    %3 = arith.muli %arg1, %c128_i32 : i32
    %4 = tpu.assume_multiple %3, 128 : i32
    %c0 = arith.constant 0 : index
    %5 = arith.index_cast %4 : i32 to index
    %6 = vector.load %arg2[%c0, %5] : memref<8x128xf32, #tpu.memory_space<vmem>>, vector<8x128xf32>
    %c0_1 = arith.constant 0 : index
    %c0_2 = arith.constant 0 : index
    %7 = vector.load %arg3[%c0_1, %c0_2] : memref<128x128xf32, #tpu.memory_space<vmem>>, vector<128x128xf32>
    %c0_3 = arith.constant 0 : index
    %c0_4 = arith.constant 0 : index
    %8 = vector.load %arg6[%c0_3, %c0_4] : memref<8x128xf32, #tpu.memory_space<vmem>>, vector<8x128xf32>
    %cst = arith.constant dense<0.000000e+00> : vector<8x128xf32>
    %9 = tpu.matmul %6, %7, %cst {dimension_numbers = #tpu.dot_dimension_numbers<[1], [0], [0], [1], [0, 0, 1, 1], [], []>, precision = #tpu.contract_precision<fp32>} : vector<8x128xf32>, vector<128x128xf32>, vector<8x128xf32> -> vector<8x128xf32>
    %10 = arith.addf %8, %9 : vector<8x128xf32>
    %c0_5 = arith.constant 0 : index
    %c0_6 = arith.constant 0 : index
    %11 = vector.load %arg6[%c0_5, %c0_6] : memref<8x128xf32, #tpu.memory_space<vmem>>, vector<8x128xf32>
    tpu.vector_store %arg6[%c0_5, %c0_6], %10 {strides = array<i32>} : memref<8x128xf32, #tpu.memory_space<vmem>>, vector<8x128xf32>,
    %c0_i32_7 = arith.constant 0 : i32
    %12 = arith.cmpi eq, %arg1, %c0_i32_7 : i32
    %13 = arith.extui %12 : i1 to i32
    %c0_i32_8 = arith.constant 0 : i32
    %14 = arith.cmpi ne, %13, %c0_i32_8 : i32
    scf.if %14 {
      %c0_9 = arith.constant 0 : index
      %c0_10 = arith.constant 0 : index
      %15 = vector.load %arg6[%c0_9, %c0_10] : memref<8x128xf32, #tpu.memory_space<vmem>>, vector<8x128xf32>
      %16 = vector.extract_strided_slice %15 {offsets = [0, 0], sizes = [1, 128], strides = [1, 1]} : vector<8x128xf32> to vector<1x128xf32>
      %17 = vector.broadcast %16 : vector<1x128xf32> to vector<8x128xf32>
      %18 = arith.subf %15, %17 : vector<8x128xf32>
      %cst_11 = arith.constant dense<0.000000e+00> : vector<128xf32>
      %19 = vector.multi_reduction <add>, %18, %cst_11 [0] : vector<8x128xf32> to vector<128xf32>
      %20 = vector.shape_cast %19 : vector<128xf32> to vector<1x128xf32>
      %cst_12 = arith.constant 1.250000e-01 : f32
      %21 = vector.broadcast %cst_12 : f32 to vector<1x128xf32>
      %22 = arith.mulf %20, %21 : vector<1x128xf32>
      %23 = arith.mulf %18, %18 : vector<8x128xf32>
      %cst_13 = arith.constant dense<0.000000e+00> : vector<128xf32>
      %24 = vector.multi_reduction <add>, %23, %cst_13 [0] : vector<8x128xf32> to vector<128xf32>
      %25 = vector.shape_cast %24 : vector<128xf32> to vector<1x128xf32>
      %cst_14 = arith.constant 1.250000e-01 : f32
      %26 = vector.broadcast %cst_14 : f32 to vector<1x128xf32>
      %27 = arith.mulf %25, %26 : vector<1x128xf32>
      %28 = arith.mulf %22, %22 : vector<1x128xf32>
      %29 = arith.subf %27, %28 : vector<1x128xf32>
      %cst_15 = arith.constant 0.000000e+00 : f32
      %30 = vector.broadcast %cst_15 : f32 to vector<1x128xf32>
      %31 = arith.maximumf %29, %30 : vector<1x128xf32>
      %32 = arith.addf %22, %16 : vector<1x128xf32>
      %c0_16 = arith.constant 0 : index
      %c0_17 = arith.constant 0 : index
      %33 = vector.load %arg4[%c0_16, %c0_17] : memref<1x128xf32, #tpu.memory_space<vmem>>, vector<1x128xf32>
      %cst_18 = arith.constant 9.99999974E-6 : f32
      %34 = vector.broadcast %cst_18 : f32 to vector<1x128xf32>
      %35 = arith.addf %31, %34 : vector<1x128xf32>
      %36 = math.rsqrt %35 : vector<1x128xf32>
      %37 = arith.mulf %33, %36 : vector<1x128xf32>
      %c0_19 = arith.constant 0 : index
      %c0_20 = arith.constant 0 : index
      %38 = vector.load %arg5[%c0_19, %c0_20] : memref<1x128xf32, #tpu.memory_space<vmem>>, vector<1x128xf32>
      %39 = arith.mulf %32, %37 : vector<1x128xf32>
      %40 = arith.subf %38, %39 : vector<1x128xf32>
      %41 = vector.broadcast %37 : vector<1x128xf32> to vector<8x128xf32>
      %42 = arith.mulf %15, %41 : vector<8x128xf32>
      %43 = vector.broadcast %40 : vector<1x128xf32> to vector<8x128xf32>
      %44 = arith.addf %42, %43 : vector<8x128xf32>
      %cst_21 = arith.constant 0.000000e+00 : f32
      %45 = vector.broadcast %cst_21 : f32 to vector<8x128xf32>
      %46 = arith.maximumf %44, %45 : vector<8x128xf32>
      %c0_22 = arith.constant 0 : index
      %c0_23 = arith.constant 0 : index
      %47 = vector.load %arg6[%c0_22, %c0_23] : memref<8x128xf32, #tpu.memory_space<vmem>>, vector<8x128xf32>
      tpu.vector_store %arg6[%c0_22, %c0_23], %46 {strides = array<i32>} : memref<8x128xf32, #tpu.memory_space<vmem>>, vector<8x128xf32>,
    } else {
    }
    return
  }
  func.func @transform_0(%arg0: i32, %arg1: i32) -> (i32, i32) {
    %c0_i32 = arith.constant 0 : i32
    %c0_i32_0 = arith.constant 0 : i32
    %c0_i32_1 = arith.constant 0 : i32
    return %c0_i32, %c0_i32_0 : i32, i32
  }
  func.func @transform_1(%arg0: i32, %arg1: i32) -> (i32, i32) {
    %c0_i32 = arith.constant 0 : i32
    return %arg1, %arg0 : i32, i32
  }
  func.func @transform_2(%arg0: i32, %arg1: i32) -> (i32, i32) {
    %c0_i32 = arith.constant 0 : i32
    %c0_i32_0 = arith.constant 0 : i32
    return %c0_i32, %arg0 : i32, i32
  }
  func.func @transform_3(%arg0: i32, %arg1: i32) -> (i32, i32) {
    %c0_i32 = arith.constant 0 : i32
    %c0_i32_0 = arith.constant 0 : i32
    return %c0_i32, %arg0 : i32, i32
  }
  func.func @transform_4(%arg0: i32, %arg1: i32) -> (i32, i32) {
    %c0_i32 = arith.constant 0 : i32
    %c0_i32_0 = arith.constant 0 : i32
    return %c0_i32, %arg0 : i32, i32
  }
}

module attributes {stable_mosaic.version = 11 : i64} {
  func.func @_linear_bn_kernel(%arg0: i32, %arg1: i32, %arg2: memref<8x128xf32, #tpu.memory_space<vmem>>, %arg3: memref<128x128xf32, #tpu.memory_space<vmem>>, %arg4: memref<1x128xf32, #tpu.memory_space<vmem>>, %arg5: memref<1x128xf32, #tpu.memory_space<vmem>>, %arg6: memref<8x128xf32, #tpu.memory_space<vmem>>) attributes {dimension_semantics = [#tpu.dimension_semantics<parallel>, #tpu.dimension_semantics<arbitrary>], iteration_bounds = array<i64: 1, 1>, scalar_prefetch = 0 : i64, scratch_operands = 0 : i64, tpu.core_type = #tpu.core_type<tc>, window_params = [{pipeline_mode = #tpu.pipeline_mode<synchronous>, transform_indices = @transform_0, window_bounds = array<i64: 8, 128>}, {transform_indices = @transform_1, window_bounds = array<i64: 128, 128>}, {transform_indices = @transform_2, window_bounds = array<i64: 1, 128>}, {transform_indices = @transform_3, window_bounds = array<i64: 1, 128>}, {transform_indices = @transform_4, window_bounds = array<i64: 8, 128>}]} {
    %c0_i32 = arith.constant 0 : i32
    %0 = arith.cmpi eq, %arg1, %c0_i32 : i32
    %1 = arith.extui %0 : i1 to i32
    %c0_i32_0 = arith.constant 0 : i32
    %2 = arith.cmpi ne, %1, %c0_i32_0 : i32
    scf.if %2 {
      %cst_9 = arith.constant 0.000000e+00 : f32
      %15 = vector.broadcast %cst_9 : f32 to vector<8x128xf32>
      %c0_10 = arith.constant 0 : index
      %c0_11 = arith.constant 0 : index
      %16 = vector.load %arg6[%c0_10, %c0_11] : memref<8x128xf32, #tpu.memory_space<vmem>>, vector<8x128xf32>
      tpu.vector_store %arg6[%c0_10, %c0_11], %15 {strides = array<i32>} : memref<8x128xf32, #tpu.memory_space<vmem>>, vector<8x128xf32>,
    } else {
    }
    %c128_i32 = arith.constant 128 : i32
    %3 = arith.muli %arg1, %c128_i32 : i32
    %4 = tpu.assume_multiple %3, 128 : i32
    %c0 = arith.constant 0 : index
    %5 = arith.index_cast %4 : i32 to index
    %6 = vector.load %arg2[%c0, %5] : memref<8x128xf32, #tpu.memory_space<vmem>>, vector<8x128xf32>
    %c0_1 = arith.constant 0 : index
    %c0_2 = arith.constant 0 : index
    %7 = vector.load %arg3[%c0_1, %c0_2] : memref<128x128xf32, #tpu.memory_space<vmem>>, vector<128x128xf32>
    %c0_3 = arith.constant 0 : index
    %c0_4 = arith.constant 0 : index
    %8 = vector.load %arg6[%c0_3, %c0_4] : memref<8x128xf32, #tpu.memory_space<vmem>>, vector<8x128xf32>
    %cst = arith.constant dense<0.000000e+00> : vector<8x128xf32>
    %9 = tpu.matmul %6, %7, %cst {dimension_numbers = #tpu.dot_dimension_numbers<[1], [0], [0], [1], [0, 0, 1, 1], [], []>, precision = #tpu.contract_precision<fp32>} : vector<8x128xf32>, vector<128x128xf32>, vector<8x128xf32> -> vector<8x128xf32>
    %10 = arith.addf %8, %9 : vector<8x128xf32>
    %c0_5 = arith.constant 0 : index
    %c0_6 = arith.constant 0 : index
    %11 = vector.load %arg6[%c0_5, %c0_6] : memref<8x128xf32, #tpu.memory_space<vmem>>, vector<8x128xf32>
    tpu.vector_store %arg6[%c0_5, %c0_6], %10 {strides = array<i32>} : memref<8x128xf32, #tpu.memory_space<vmem>>, vector<8x128xf32>,
    %c0_i32_7 = arith.constant 0 : i32
    %12 = arith.cmpi eq, %arg1, %c0_i32_7 : i32
    %13 = arith.extui %12 : i1 to i32
    %c0_i32_8 = arith.constant 0 : i32
    %14 = arith.cmpi ne, %13, %c0_i32_8 : i32
    scf.if %14 {
      %c0_9 = arith.constant 0 : index
      %c0_10 = arith.constant 0 : index
      %15 = vector.load %arg6[%c0_9, %c0_10] : memref<8x128xf32, #tpu.memory_space<vmem>>, vector<8x128xf32>
      %16 = vector.extract_strided_slice %15 {offsets = [0, 0], sizes = [1, 128], strides = [1, 1]} : vector<8x128xf32> to vector<1x128xf32>
      %17 = vector.broadcast %16 : vector<1x128xf32> to vector<8x128xf32>
      %18 = arith.subf %15, %17 : vector<8x128xf32>
      %cst_11 = arith.constant dense<0.000000e+00> : vector<128xf32>
      %19 = vector.multi_reduction <add>, %18, %cst_11 [0] : vector<8x128xf32> to vector<128xf32>
      %20 = vector.shape_cast %19 : vector<128xf32> to vector<1x128xf32>
      %cst_12 = arith.constant 1.250000e-01 : f32
      %21 = vector.broadcast %cst_12 : f32 to vector<1x128xf32>
      %22 = arith.mulf %20, %21 : vector<1x128xf32>
      %23 = arith.mulf %18, %18 : vector<8x128xf32>
      %cst_13 = arith.constant dense<0.000000e+00> : vector<128xf32>
      %24 = vector.multi_reduction <add>, %23, %cst_13 [0] : vector<8x128xf32> to vector<128xf32>
      %25 = vector.shape_cast %24 : vector<128xf32> to vector<1x128xf32>
      %cst_14 = arith.constant 1.250000e-01 : f32
      %26 = vector.broadcast %cst_14 : f32 to vector<1x128xf32>
      %27 = arith.mulf %25, %26 : vector<1x128xf32>
      %28 = arith.mulf %22, %22 : vector<1x128xf32>
      %29 = arith.subf %27, %28 : vector<1x128xf32>
      %cst_15 = arith.constant 0.000000e+00 : f32
      %30 = vector.broadcast %cst_15 : f32 to vector<1x128xf32>
      %31 = arith.maximumf %29, %30 : vector<1x128xf32>
      %32 = arith.addf %22, %16 : vector<1x128xf32>
      %c0_16 = arith.constant 0 : index
      %c0_17 = arith.constant 0 : index
      %33 = vector.load %arg4[%c0_16, %c0_17] : memref<1x128xf32, #tpu.memory_space<vmem>>, vector<1x128xf32>
      %cst_18 = arith.constant 9.99999974E-6 : f32
      %34 = vector.broadcast %cst_18 : f32 to vector<1x128xf32>
      %35 = arith.addf %31, %34 : vector<1x128xf32>
      %36 = math.rsqrt %35 : vector<1x128xf32>
      %37 = arith.mulf %33, %36 : vector<1x128xf32>
      %c0_19 = arith.constant 0 : index
      %c0_20 = arith.constant 0 : index
      %38 = vector.load %arg5[%c0_19, %c0_20] : memref<1x128xf32, #tpu.memory_space<vmem>>, vector<1x128xf32>
      %39 = arith.mulf %32, %37 : vector<1x128xf32>
      %40 = arith.subf %38, %39 : vector<1x128xf32>
      %41 = vector.broadcast %37 : vector<1x128xf32> to vector<8x128xf32>
      %42 = arith.mulf %15, %41 : vector<8x128xf32>
      %43 = vector.broadcast %40 : vector<1x128xf32> to vector<8x128xf32>
      %44 = arith.addf %42, %43 : vector<8x128xf32>
      %c0_21 = arith.constant 0 : index
      %c0_22 = arith.constant 0 : index
      %45 = vector.load %arg6[%c0_21, %c0_22] : memref<8x128xf32, #tpu.memory_space<vmem>>, vector<8x128xf32>
      tpu.vector_store %arg6[%c0_21, %c0_22], %44 {strides = array<i32>} : memref<8x128xf32, #tpu.memory_space<vmem>>, vector<8x128xf32>,
    } else {
    }
    return
  }
  func.func @transform_0(%arg0: i32, %arg1: i32) -> (i32, i32) {
    %c0_i32 = arith.constant 0 : i32
    %c0_i32_0 = arith.constant 0 : i32
    %c0_i32_1 = arith.constant 0 : i32
    return %c0_i32, %c0_i32_0 : i32, i32
  }
  func.func @transform_1(%arg0: i32, %arg1: i32) -> (i32, i32) {
    %c0_i32 = arith.constant 0 : i32
    return %arg1, %arg0 : i32, i32
  }
  func.func @transform_2(%arg0: i32, %arg1: i32) -> (i32, i32) {
    %c0_i32 = arith.constant 0 : i32
    %c0_i32_0 = arith.constant 0 : i32
    return %c0_i32, %arg0 : i32, i32
  }
  func.func @transform_3(%arg0: i32, %arg1: i32) -> (i32, i32) {
    %c0_i32 = arith.constant 0 : i32
    %c0_i32_0 = arith.constant 0 : i32
    return %c0_i32, %arg0 : i32, i32
  }
  func.func @transform_4(%arg0: i32, %arg1: i32) -> (i32, i32) {
    %c0_i32 = arith.constant 0 : i32
    %c0_i32_0 = arith.constant 0 : i32
    return %c0_i32, %arg0 : i32, i32
  }
}

</mosaic_0001>

<llo_original>
// kernel: _forward.3
$region0: #{_forward.3}
  #allocation0 [shape = 'u32[]', space=smem, size = 0x4, offset = 0x4, fixed_abs, tag = 'smem constant byte address 0x4 - core index']
  #allocation1 [shape = 'u32[144,128]{1,0:T(1,128)}', space=vmem, size = 0x12000, scoped, tag = 'internal scratch']
  %s0 = inlined_call_operand.vmem [shape: f32[8,128], index: 0, kind: input, shape index: {}]
  %s1 = inlined_call_operand.vmem [shape: f32[128,128], index: 1, kind: input, shape index: {}]
  %s2 = inlined_call_operand.vmem [shape: f32[1,128], index: 2, kind: input, shape index: {}]
  %s3 = inlined_call_operand.vmem [shape: f32[1,128], index: 3, kind: input, shape index: {}]
  %s4 = inlined_call_operand.vmem [shape: f32[8,128], index: 4, kind: output, shape index: {}]
  %s5 = sld [smem:[#allocation0]]
  $region34: #{_forward.3} parent=0
    _
  %s7 = ssub.s32 1, %s5
  %s8 = scalar_select 0, %s7, %s5
  // Predicated region
  $region2: #{_forward.3} parent=0 // pred_check
    _
  $region3: #{_forward.3} parent=0 // pred_check_branch
    %10 = sbr.rel (0) target = $region5
  $region4: #{_forward.3} parent=0 // pred_region
    _
  $region5: #{_forward.3} parent=0 // pred_fallthru
    _
  // Predicated region
  $region6: #{_forward.3} parent=0 // pred_check
    _
  $region7: #{_forward.3} parent=0 // pred_check_branch
    %12 = sbr.rel (0) target = $region9
  $region8: #{_forward.3} parent=0 // pred_region
    _
  $region9: #{_forward.3} parent=0 // pred_fallthru
    _
  // Predicated region
  $region10: #{_forward.3} parent=0 // pred_check
    _
  $region11: #{_forward.3} parent=0 // pred_check_branch
    %14 = sbr.rel (0) target = $region13
  $region12: #{_forward.3} parent=0 // pred_region
    _
  $region13: #{_forward.3} parent=0 // pred_fallthru
    _
  // Predicated region
  $region14: #{_forward.3} parent=0 // pred_check
    _
  $region15: #{_forward.3} parent=0 // pred_check_branch
    %16 = sbr.rel (0) target = $region17
  $region16: #{_forward.3} parent=0 // pred_region
    _
  $region17: #{_forward.3} parent=0 // pred_fallthru
    _
  %p17 = scmp.eq.s32.totalorder 0, 0
  // Predicated region
  $region18: #{_forward.3} parent=0 // pred_check
    %p18 = pneg %p17
  $region19: #{_forward.3} parent=0 // pred_check_branch
    %20 = sbr.rel (%p18) target = $region21
  $region20: #{_forward.3} parent=0 // pred_region
    %21 = vst [vmem:[%s4] sm:$0xff] 0.0
  $region21: #{_forward.3} parent=0 // pred_fallthru
    _
  %s22 = smul.u32 0, 128
  %s23 = sshra.s32 %s22, 7
  %s24 = sand.u32 %s22, 127
  %s25 = scalar_lea.vmem %s0, %s23
  %v26 = vld [vmem:[%s25] sm:$0xff]
  %v27 = vld [vmem:[%s1] sm:$0xff]
  %v28 = vld [vmem:[%s1 + $0x8] sm:$0xff]
  %v29 = vld [vmem:[%s1 + $0x10] sm:$0xff]
  %v30 = vld [vmem:[%s1 + $0x18] sm:$0xff]
  %v31 = vld [vmem:[%s1 + $0x20] sm:$0xff]
  %v32 = vld [vmem:[%s1 + $0x28] sm:$0xff]
  %v33 = vld [vmem:[%s1 + $0x30] sm:$0xff]
  %v34 = vld [vmem:[%s1 + $0x38] sm:$0xff]
  %v35 = vld [vmem:[%s1 + $0x40] sm:$0xff]
  %v36 = vld [vmem:[%s1 + $0x48] sm:$0xff]
  %v37 = vld [vmem:[%s1 + $0x50] sm:$0xff]
  %v38 = vld [vmem:[%s1 + $0x58] sm:$0xff]
  %v39 = vld [vmem:[%s1 + $0x60] sm:$0xff]
  %v40 = vld [vmem:[%s1 + $0x68] sm:$0xff]
  %v41 = vld [vmem:[%s1 + $0x70] sm:$0xff]
  %v42 = vld [vmem:[%s1 + $0x78] sm:$0xff]
  %v43 = vld [vmem:[%s4] sm:$0xff]
  %44 = vmatprep.subr.mxu0 0.0
  %v45 = vand.u32 %v27, 4294901760
  %46 = vmatpush1.msra.mxu0 %v45
  %47 = vmatprep.subr.mxu0 0.0
  %v48 = vand.u32 %v28, 4294901760
  %49 = vmatpush1.msra.mxu0 %v48
  %50 = vmatprep.subr.mxu0 0.0
  %v51 = vand.u32 %v29, 4294901760
  %52 = vmatpush1.msra.mxu0 %v51
  %53 = vmatprep.subr.mxu0 0.0
  %v54 = vand.u32 %v30, 4294901760
  %55 = vmatpush1.msra.mxu0 %v54
  %56 = vmatprep.subr.mxu0 0.0
  %v57 = vand.u32 %v31, 4294901760
  %58 = vmatpush1.msra.mxu0 %v57
  %59 = vmatprep.subr.mxu0 0.0
  %v60 = vand.u32 %v32, 4294901760
  %61 = vmatpush1.msra.mxu0 %v60
  %62 = vmatprep.subr.mxu0 0.0
  %v63 = vand.u32 %v33, 4294901760
  %64 = vmatpush1.msra.mxu0 %v63
  %65 = vmatprep.subr.mxu0 0.0
  %v66 = vand.u32 %v34, 4294901760
  %67 = vmatpush1.msra.mxu0 %v66
  %68 = vmatprep.subr.mxu0 0.0
  %v69 = vand.u32 %v35, 4294901760
  %70 = vmatpush1.msra.mxu0 %v69
  %71 = vmatprep.subr.mxu0 0.0
  %v72 = vand.u32 %v36, 4294901760
  %73 = vmatpush1.msra.mxu0 %v72
  %74 = vmatprep.subr.mxu0 0.0
  %v75 = vand.u32 %v37, 4294901760
  %76 = vmatpush1.msra.mxu0 %v75
  %77 = vmatprep.subr.mxu0 0.0
  %v78 = vand.u32 %v38, 4294901760
  %79 = vmatpush1.msra.mxu0 %v78
  %80 = vmatprep.subr.mxu0 0.0
  %v81 = vand.u32 %v39, 4294901760
  %82 = vmatpush1.msra.mxu0 %v81
  %83 = vmatprep.subr.mxu0 0.0
  %v84 = vand.u32 %v40, 4294901760
  %85 = vmatpush1.msra.mxu0 %v84
  %86 = vmatprep.subr.mxu0 0.0
  %v87 = vand.u32 %v41, 4294901760
  %88 = vmatpush1.msra.mxu0 %v87
  %89 = vmatprep.subr.mxu0 0.0
  %v90 = vand.u32 %v42, 4294901760
  %91 = vmatpush1.msra.mxu0 %v90
  %92 = vmatprep.subr.mxu0 0.0
  %93 = vmatpush1.msra.mxu0 0.0
  %94 = vmatprep.subr.mxu0 0.0
  %95 = vmatpush1.msra.mxu0 0.0
  %96 = vmatprep.subr.mxu0 0.0
  %97 = vmatpush1.msra.mxu0 0.0
  %98 = vmatprep.subr.mxu0 0.0
  %99 = vmatpush1.msra.mxu0 0.0
  %100 = vmatprep.subr.mxu0 0.0
  %101 = vmatpush1.msra.mxu0 0.0
  %102 = vmatprep.subr.mxu0 0.0
  %103 = vmatpush1.msra.mxu0 0.0
  %104 = vmatprep.subr.mxu0 0.0
  %105 = vmatpush1.msra.mxu0 0.0
  %106 = vmatprep.subr.mxu0 0.0
  %107 = vmatpush1.msra.mxu0 0.0
  %108 = vmatprep.subr.mxu0 0.0
  %109 = vmatpush1.msra.mxu0 0.0
  %110 = vmatprep.subr.mxu0 0.0
  %111 = vmatpush1.msra.mxu0 0.0
  %112 = vmatprep.subr.mxu0 0.0
  %113 = vmatpush1.msra.mxu0 0.0
  %114 = vmatprep.subr.mxu0 0.0
  %115 = vmatpush1.msra.mxu0 0.0
  %116 = vmatprep.subr.mxu0 0.0
  %117 = vmatpush1.msra.mxu0 0.0
  %118 = vmatprep.subr.mxu0 0.0
  %119 = vmatpush1.msra.mxu0 0.0
  %120 = vmatprep.subr.mxu0 0.0
  %121 = vmatpush1.msra.mxu0 0.0
  %122 = vmatprep.subr.mxu0 0.0
  %123 = vmatpush1.msra.mxu0 0.0
  %124 = vmatprep.mubr.f32.mxu0 0.0
  %v125 = vand.u32 %v26, 4294901760
  %v126 = vsub.f32 %v26, %v125
  %v127 = vand.u32 %v126, 4294901760
  %v128 = vsub.f32 %v126, %v127
  %v129 = vand.u32 %v128, 4294901760
  %130 = vmatmul.mubr.f32.gmra.mrb[0].mxu0 %v129
  %v131 = vpop.f32.mrb[0].mxu0
  %v132 = vadd.f32 0.0, %v131
  %v133 = vpop.f32.mrb[0].mxu0
  %134 = vdwg.mxu0
  %135 = vmatprep.subr.mxu0 0.0
  %v136 = vand.u32 %v27, 4294901760
  %v137 = vsub.f32 %v27, %v136
  %v138 = vand.u32 %v137, 4294901760
  %v139 = vsub.f32 %v137, %v138
  %v140 = vand.u32 %v139, 4294901760
  %141 = vmatpush1.msra.mxu0 %v140
  %142 = vmatprep.subr.mxu0 0.0
  %v143 = vand.u32 %v28, 4294901760
  %v144 = vsub.f32 %v28, %v143
  %v145 = vand.u32 %v144, 4294901760
  %v146 = vsub.f32 %v144, %v145
  %v147 = vand.u32 %v146, 4294901760
  %148 = vmatpush1.msra.mxu0 %v147
  %149 = vmatprep.subr.mxu0 0.0
  %v150 = vand.u32 %v29, 4294901760
  %v151 = vsub.f32 %v29, %v150
  %v152 = vand.u32 %v151, 4294901760
  %v153 = vsub.f32 %v151, %v152
  %v154 = vand.u32 %v153, 4294901760
  %155 = vmatpush1.msra.mxu0 %v154
  %156 = vmatprep.subr.mxu0 0.0
  %v157 = vand.u32 %v30, 4294901760
  %v158 = vsub.f32 %v30, %v157
  %v159 = vand.u32 %v158, 4294901760
  %v160 = vsub.f32 %v158, %v159
  %v161 = vand.u32 %v160, 4294901760
  %162 = vmatpush1.msra.mxu0 %v161
  %163 = vmatprep.subr.mxu0 0.0
  %v164 = vand.u32 %v31, 4294901760
  %v165 = vsub.f32 %v31, %v164
  %v166 = vand.u32 %v165, 4294901760
  %v167 = vsub.f32 %v165, %v166
  %v168 = vand.u32 %v167, 4294901760
  %169 = vmatpush1.msra.mxu0 %v168
  %170 = vmatprep.subr.mxu0 0.0
  %v171 = vand.u32 %v32, 4294901760
  %v172 = vsub.f32 %v32, %v171
  %v173 = vand.u32 %v172, 4294901760
  %v174 = vsub.f32 %v172, %v173
  %v175 = vand.u32 %v174, 4294901760
  %176 = vmatpush1.msra.mxu0 %v175
  %177 = vmatprep.subr.mxu0 0.0
  %v178 = vand.u32 %v33, 4294901760
  %v179 = vsub.f32 %v33, %v178
  %v180 = vand.u32 %v179, 4294901760
  %v181 = vsub.f32 %v179, %v180
  %v182 = vand.u32 %v181, 4294901760
  %183 = vmatpush1.msra.mxu0 %v182
  %184 = vmatprep.subr.mxu0 0.0
  %v185 = vand.u32 %v34, 4294901760
  %v186 = vsub.f32 %v34, %v185
  %v187 = vand.u32 %v186, 4294901760
  %v188 = vsub.f32 %v186, %v187
  %v189 = vand.u32 %v188, 4294901760
  %190 = vmatpush1.msra.mxu0 %v189
  %191 = vmatprep.subr.mxu0 0.0
  %v192 = vand.u32 %v35, 4294901760
  %v193 = vsub.f32 %v35, %v192
  %v194 = vand.u32 %v193, 4294901760
  %v195 = vsub.f32 %v193, %v194
  %v196 = vand.u32 %v195, 4294901760
  %197 = vmatpush1.msra.mxu0 %v196
  %198 = vmatprep.subr.mxu0 0.0
  %v199 = vand.u32 %v36, 4294901760
  %v200 = vsub.f32 %v36, %v199
  %v201 = vand.u32 %v200, 4294901760
  %v202 = vsub.f32 %v200, %v201
  %v203 = vand.u32 %v202, 4294901760
  %204 = vmatpush1.msra.mxu0 %v203
  %205 = vmatprep.subr.mxu0 0.0
  %v206 = vand.u32 %v37, 4294901760
  %v207 = vsub.f32 %v37, %v206
  %v208 = vand.u32 %v207, 4294901760
  %v209 = vsub.f32 %v207, %v208
  %v210 = vand.u32 %v209, 4294901760
  %211 = vmatpush1.msra.mxu0 %v210
  %212 = vmatprep.subr.mxu0 0.0
  %v213 = vand.u32 %v38, 4294901760
  %v214 = vsub.f32 %v38, %v213
  %v215 = vand.u32 %v214, 4294901760
  %v216 = vsub.f32 %v214, %v215
  %v217 = vand.u32 %v216, 4294901760
  %218 = vmatpush1.msra.mxu0 %v217
  %219 = vmatprep.subr.mxu0 0.0
  %v220 = vand.u32 %v39, 4294901760
  %v221 = vsub.f32 %v39, %v220
  %v222 = vand.u32 %v221, 4294901760
  %v223 = vsub.f32 %v221, %v222
  %v224 = vand.u32 %v223, 4294901760
  %225 = vmatpush1.msra.mxu0 %v224
  %226 = vmatprep.subr.mxu0 0.0
  %v227 = vand.u32 %v40, 4294901760
  %v228 = vsub.f32 %v40, %v227
  %v229 = vand.u32 %v228, 4294901760
  %v230 = vsub.f32 %v228, %v229
  %v231 = vand.u32 %v230, 4294901760
  %232 = vmatpush1.msra.mxu0 %v231
  %233 = vmatprep.subr.mxu0 0.0
  %v234 = vand.u32 %v41, 4294901760
  %v235 = vsub.f32 %v41, %v234
  %v236 = vand.u32 %v235, 4294901760
  %v237 = vsub.f32 %v235, %v236
  %v238 = vand.u32 %v237, 4294901760
  %239 = vmatpush1.msra.mxu0 %v238
  %240 = vmatprep.subr.mxu0 0.0
  %v241 = vand.u32 %v42, 4294901760
  %v242 = vsub.f32 %v42, %v241
  %v243 = vand.u32 %v242, 4294901760
  %v244 = vsub.f32 %v242, %v243
  %v245 = vand.u32 %v244, 4294901760
  %246 = vmatpush1.msra.mxu0 %v245
  %247 = vmatprep.subr.mxu0 0.0
  %248 = vmatpush1.msra.mxu0 0.0
  %249 = vmatprep.subr.mxu0 0.0
  %250 = vmatpush1.msra.mxu0 0.0
  %251 = vmatprep.subr.mxu0 0.0
  %252 = vmatpush1.msra.mxu0 0.0
  %253 = vmatprep.subr.mxu0 0.0
  %254 = vmatpush1.msra.mxu0 0.0
  %255 = vmatprep.subr.mxu0 0.0
  %256 = vmatpush1.msra.mxu0 0.0
  %257 = vmatprep.subr.mxu0 0.0
  %258 = vmatpush1.msra.mxu0 0.0
  %259 = vmatprep.subr.mxu0 0.0
  %260 = vmatpush1.msra.mxu0 0.0
  %261 = vmatprep.subr.mxu0 0.0
  %262 = vmatpush1.msra.mxu0 0.0
  %263 = vmatprep.subr.mxu0 0.0
  %264 = vmatpush1.msra.mxu0 0.0
  %265 = vmatprep.subr.mxu0 0.0
  %266 = vmatpush1.msra.mxu0 0.0
  %267 = vmatprep.subr.mxu0 0.0
  %268 = vmatpush1.msra.mxu0 0.0
  %269 = vmatprep.subr.mxu0 0.0
  %270 = vmatpush1.msra.mxu0 0.0
  %271 = vmatprep.subr.mxu0 0.0
  %272 = vmatpush1.msra.mxu0 0.0
  %273 = vmatprep.subr.mxu0 0.0
  %274 = vmatpush1.msra.mxu0 0.0
  %275 = vmatprep.subr.mxu0 0.0
  %276 = vmatpush1.msra.mxu0 0.0
  %277 = vmatprep.subr.mxu0 0.0
  %278 = vmatpush1.msra.mxu0 0.0
  %279 = vmatprep.mubr.f32.mxu0 0.0
  %v280 = vand.u32 %v26, 4294901760
  %281 = vmatmul.mubr.f32.gmra.mrb[0].mxu0 %v280
  %v282 = vpop.f32.mrb[0].mxu0
  %v283 = vadd.f32 %v132, %v282
  %v284 = vpop.f32.mrb[0].mxu0
  %285 = vdwg.mxu0
  %286 = vmatprep.subr.mxu0 0.0
  %v287 = vand.u32 %v27, 4294901760
  %v288 = vsub.f32 %v27, %v287
  %289 = vmatpush1.msra.mxu0 %v288
  %290 = vmatprep.subr.mxu0 0.0
  %v291 = vand.u32 %v28, 4294901760
  %v292 = vsub.f32 %v28, %v291
  %293 = vmatpush1.msra.mxu0 %v292
  %294 = vmatprep.subr.mxu0 0.0
  %v295 = vand.u32 %v29, 4294901760
  %v296 = vsub.f32 %v29, %v295
  %297 = vmatpush1.msra.mxu0 %v296
  %298 = vmatprep.subr.mxu0 0.0
  %v299 = vand.u32 %v30, 4294901760
  %v300 = vsub.f32 %v30, %v299
  %301 = vmatpush1.msra.mxu0 %v300
  %302 = vmatprep.subr.mxu0 0.0
  %v303 = vand.u32 %v31, 4294901760
  %v304 = vsub.f32 %v31, %v303
  %305 = vmatpush1.msra.mxu0 %v304
  %306 = vmatprep.subr.mxu0 0.0
  %v307 = vand.u32 %v32, 4294901760
  %v308 = vsub.f32 %v32, %v307
  %309 = vmatpush1.msra.mxu0 %v308
  %310 = vmatprep.subr.mxu0 0.0
  %v311 = vand.u32 %v33, 4294901760
  %v312 = vsub.f32 %v33, %v311
  %313 = vmatpush1.msra.mxu0 %v312
  %314 = vmatprep.subr.mxu0 0.0
  %v315 = vand.u32 %v34, 4294901760
  %v316 = vsub.f32 %v34, %v315
  %317 = vmatpush1.msra.mxu0 %v316
  %318 = vmatprep.subr.mxu0 0.0
  %v319 = vand.u32 %v35, 4294901760
  %v320 = vsub.f32 %v35, %v319
  %321 = vmatpush1.msra.mxu0 %v320
  %322 = vmatprep.subr.mxu0 0.0
  %v323 = vand.u32 %v36, 4294901760
  %v324 = vsub.f32 %v36, %v323
  %325 = vmatpush1.msra.mxu0 %v324
  %326 = vmatprep.subr.mxu0 0.0
  %v327 = vand.u32 %v37, 4294901760
  %v328 = vsub.f32 %v37, %v327
  %329 = vmatpush1.msra.mxu0 %v328
  %330 = vmatprep.subr.mxu0 0.0
  %v331 = vand.u32 %v38, 4294901760
  %v332 = vsub.f32 %v38, %v331
  %333 = vmatpush1.msra.mxu0 %v332
  %334 = vmatprep.subr.mxu0 0.0
  %v335 = vand.u32 %v39, 4294901760
  %v336 = vsub.f32 %v39, %v335
  %337 = vmatpush1.msra.mxu0 %v336
  %338 = vmatprep.subr.mxu0 0.0
  %v339 = vand.u32 %v40, 4294901760
  %v340 = vsub.f32 %v40, %v339
  %341 = vmatpush1.msra.mxu0 %v340
  %342 = vmatprep.subr.mxu0 0.0
  %v343 = vand.u32 %v41, 4294901760
  %v344 = vsub.f32 %v41, %v343
  %345 = vmatpush1.msra.mxu0 %v344
  %346 = vmatprep.subr.mxu0 0.0
  %v347 = vand.u32 %v42, 4294901760
  %v348 = vsub.f32 %v42, %v347
  %349 = vmatpush1.msra.mxu0 %v348
  %350 = vmatprep.subr.mxu0 0.0
  %351 = vmatpush1.msra.mxu0 0.0
  %352 = vmatprep.subr.mxu0 0.0
  %353 = vmatpush1.msra.mxu0 0.0
  %354 = vmatprep.subr.mxu0 0.0
  %355 = vmatpush1.msra.mxu0 0.0
  %356 = vmatprep.subr.mxu0 0.0
  %357 = vmatpush1.msra.mxu0 0.0
  %358 = vmatprep.subr.mxu0 0.0
  %359 = vmatpush1.msra.mxu0 0.0
  %360 = vmatprep.subr.mxu0 0.0
  %361 = vmatpush1.msra.mxu0 0.0
  %362 = vmatprep.subr.mxu0 0.0
  %363 = vmatpush1.msra.mxu0 0.0
  %364 = vmatprep.subr.mxu0 0.0
  %365 = vmatpush1.msra.mxu0 0.0
  %366 = vmatprep.subr.mxu0 0.0
  %367 = vmatpush1.msra.mxu0 0.0
  %368 = vmatprep.subr.mxu0 0.0
  %369 = vmatpush1.msra.mxu0 0.0
  %370 = vmatprep.subr.mxu0 0.0
  %371 = vmatpush1.msra.mxu0 0.0
  %372 = vmatprep.subr.mxu0 0.0
  %373 = vmatpush1.msra.mxu0 0.0
  %374 = vmatprep.subr.mxu0 0.0
  %375 = vmatpush1.msra.mxu0 0.0
  %376 = vmatprep.subr.mxu0 0.0
  %377 = vmatpush1.msra.mxu0 0.0
  %378 = vmatprep.subr.mxu0 0.0
  %379 = vmatpush1.msra.mxu0 0.0
  %380 = vmatprep.subr.mxu0 0.0
  %381 = vmatpush1.msra.mxu0 0.0
  %382 = vmatprep.mubr.f32.mxu0 0.0
  %v383 = vand.u32 %v26, 4294901760
  %v384 = vsub.f32 %v26, %v383
  %385 = vmatmul.mubr.f32.gmra.mrb[0].mxu0 %v384
  %v386 = vpop.f32.mrb[0].mxu0
  %v387 = vadd.f32 %v283, %v386
  %v388 = vpop.f32.mrb[0].mxu0
  %389 = vdwg.mxu0
  %390 = vmatprep.subr.mxu0 0.0
  %v391 = vand.u32 %v27, 4294901760
  %392 = vmatpush1.msra.mxu0 %v391
  %393 = vmatprep.subr.mxu0 0.0
  %v394 = vand.u32 %v28, 4294901760
  %395 = vmatpush1.msra.mxu0 %v394
  %396 = vmatprep.subr.mxu0 0.0
  %v397 = vand.u32 %v29, 4294901760
  %398 = vmatpush1.msra.mxu0 %v397
  %399 = vmatprep.subr.mxu0 0.0
  %v400 = vand.u32 %v30, 4294901760
  %401 = vmatpush1.msra.mxu0 %v400
  %402 = vmatprep.subr.mxu0 0.0
  %v403 = vand.u32 %v31, 4294901760
  %404 = vmatpush1.msra.mxu0 %v403
  %405 = vmatprep.subr.mxu0 0.0
  %v406 = vand.u32 %v32, 4294901760
  %407 = vmatpush1.msra.mxu0 %v406
  %408 = vmatprep.subr.mxu0 0.0
  %v409 = vand.u32 %v33, 4294901760
  %410 = vmatpush1.msra.mxu0 %v409
  %411 = vmatprep.subr.mxu0 0.0
  %v412 = vand.u32 %v34, 4294901760
  %413 = vmatpush1.msra.mxu0 %v412
  %414 = vmatprep.subr.mxu0 0.0
  %v415 = vand.u32 %v35, 4294901760
  %416 = vmatpush1.msra.mxu0 %v415
  %417 = vmatprep.subr.mxu0 0.0
  %v418 = vand.u32 %v36, 4294901760
  %419 = vmatpush1.msra.mxu0 %v418
  %420 = vmatprep.subr.mxu0 0.0
  %v421 = vand.u32 %v37, 4294901760
  %422 = vmatpush1.msra.mxu0 %v421
  %423 = vmatprep.subr.mxu0 0.0
  %v424 = vand.u32 %v38, 4294901760
  %425 = vmatpush1.msra.mxu0 %v424
  %426 = vmatprep.subr.mxu0 0.0
  %v427 = vand.u32 %v39, 4294901760
  %428 = vmatpush1.msra.mxu0 %v427
  %429 = vmatprep.subr.mxu0 0.0
  %v430 = vand.u32 %v40, 4294901760
  %431 = vmatpush1.msra.mxu0 %v430
  %432 = vmatprep.subr.mxu0 0.0
  %v433 = vand.u32 %v41, 4294901760
  %434 = vmatpush1.msra.mxu0 %v433
  %435 = vmatprep.subr.mxu0 0.0
  %v436 = vand.u32 %v42, 4294901760
  %437 = vmatpush1.msra.mxu0 %v436
  %438 = vmatprep.subr.mxu0 0.0
  %439 = vmatpush1.msra.mxu0 0.0
  %440 = vmatprep.subr.mxu0 0.0
  %441 = vmatpush1.msra.mxu0 0.0
  %442 = vmatprep.subr.mxu0 0.0
  %443 = vmatpush1.msra.mxu0 0.0
  %444 = vmatprep.subr.mxu0 0.0
  %445 = vmatpush1.msra.mxu0 0.0
  %446 = vmatprep.subr.mxu0 0.0
  %447 = vmatpush1.msra.mxu0 0.0
  %448 = vmatprep.subr.mxu0 0.0
  %449 = vmatpush1.msra.mxu0 0.0
  %450 = vmatprep.subr.mxu0 0.0
  %451 = vmatpush1.msra.mxu0 0.0
  %452 = vmatprep.subr.mxu0 0.0
  %453 = vmatpush1.msra.mxu0 0.0
  %454 = vmatprep.subr.mxu0 0.0
  %455 = vmatpush1.msra.mxu0 0.0
  %456 = vmatprep.subr.mxu0 0.0
  %457 = vmatpush1.msra.mxu0 0.0
  %458 = vmatprep.subr.mxu0 0.0
  %459 = vmatpush1.msra.mxu0 0.0
  %460 = vmatprep.subr.mxu0 0.0
  %461 = vmatpush1.msra.mxu0 0.0
  %462 = vmatprep.subr.mxu0 0.0
  %463 = vmatpush1.msra.mxu0 0.0
  %464 = vmatprep.subr.mxu0 0.0
  %465 = vmatpush1.msra.mxu0 0.0
  %466 = vmatprep.subr.mxu0 0.0
  %467 = vmatpush1.msra.mxu0 0.0
  %468 = vmatprep.subr.mxu0 0.0
  %469 = vmatpush1.msra.mxu0 0.0
  %470 = vmatprep.mubr.f32.mxu0 0.0
  %v471 = vand.u32 %v26, 4294901760
  %v472 = vsub.f32 %v26, %v471
  %v473 = vand.u32 %v472, 4294901760
  %474 = vmatmul.mubr.f32.gmra.mrb[0].mxu0 %v473
  %v475 = vpop.f32.mrb[0].mxu0
  %v476 = vadd.f32 %v387, %v475
  %v477 = vpop.f32.mrb[0].mxu0
  %478 = vdwg.mxu0
  %479 = vmatprep.subr.mxu0 0.0
  %v480 = vand.u32 %v27, 4294901760
  %v481 = vsub.f32 %v27, %v480
  %v482 = vand.u32 %v481, 4294901760
  %483 = vmatpush1.msra.mxu0 %v482
  %484 = vmatprep.subr.mxu0 0.0
  %v485 = vand.u32 %v28, 4294901760
  %v486 = vsub.f32 %v28, %v485
  %v487 = vand.u32 %v486, 4294901760
  %488 = vmatpush1.msra.mxu0 %v487
  %489 = vmatprep.subr.mxu0 0.0
  %v490 = vand.u32 %v29, 4294901760
  %v491 = vsub.f32 %v29, %v490
  %v492 = vand.u32 %v491, 4294901760
  %493 = vmatpush1.msra.mxu0 %v492
  %494 = vmatprep.subr.mxu0 0.0
  %v495 = vand.u32 %v30, 4294901760
  %v496 = vsub.f32 %v30, %v495
  %v497 = vand.u32 %v496, 4294901760
  %498 = vmatpush1.msra.mxu0 %v497
  %499 = vmatprep.subr.mxu0 0.0
  %v500 = vand.u32 %v31, 4294901760
  %v501 = vsub.f32 %v31, %v500
  %v502 = vand.u32 %v501, 4294901760
  %503 = vmatpush1.msra.mxu0 %v502
  %504 = vmatprep.subr.mxu0 0.0
  %v505 = vand.u32 %v32, 4294901760
  %v506 = vsub.f32 %v32, %v505
  %v507 = vand.u32 %v506, 4294901760
  %508 = vmatpush1.msra.mxu0 %v507
  %509 = vmatprep.subr.mxu0 0.0
  %v510 = vand.u32 %v33, 4294901760
  %v511 = vsub.f32 %v33, %v510
  %v512 = vand.u32 %v511, 4294901760
  %513 = vmatpush1.msra.mxu0 %v512
  %514 = vmatprep.subr.mxu0 0.0
  %v515 = vand.u32 %v34, 4294901760
  %v516 = vsub.f32 %v34, %v515
  %v517 = vand.u32 %v516, 4294901760
  %518 = vmatpush1.msra.mxu0 %v517
  %519 = vmatprep.subr.mxu0 0.0
  %v520 = vand.u32 %v35, 4294901760
  %v521 = vsub.f32 %v35, %v520
  %v522 = vand.u32 %v521, 4294901760
  %523 = vmatpush1.msra.mxu0 %v522
  %524 = vmatprep.subr.mxu0 0.0
  %v525 = vand.u32 %v36, 4294901760
  %v526 = vsub.f32 %v36, %v525
  %v527 = vand.u32 %v526, 4294901760
  %528 = vmatpush1.msra.mxu0 %v527
  %529 = vmatprep.subr.mxu0 0.0
  %v530 = vand.u32 %v37, 4294901760
  %v531 = vsub.f32 %v37, %v530
  %v532 = vand.u32 %v531, 4294901760
  %533 = vmatpush1.msra.mxu0 %v532
  %534 = vmatprep.subr.mxu0 0.0
  %v535 = vand.u32 %v38, 4294901760
  %v536 = vsub.f32 %v38, %v535
  %v537 = vand.u32 %v536, 4294901760
  %538 = vmatpush1.msra.mxu0 %v537
  %539 = vmatprep.subr.mxu0 0.0
  %v540 = vand.u32 %v39, 4294901760
  %v541 = vsub.f32 %v39, %v540
  %v542 = vand.u32 %v541, 4294901760
  %543 = vmatpush1.msra.mxu0 %v542
  %544 = vmatprep.subr.mxu0 0.0
  %v545 = vand.u32 %v40, 4294901760
  %v546 = vsub.f32 %v40, %v545
  %v547 = vand.u32 %v546, 4294901760
  %548 = vmatpush1.msra.mxu0 %v547
  %549 = vmatprep.subr.mxu0 0.0
  %v550 = vand.u32 %v41, 4294901760
  %v551 = vsub.f32 %v41, %v550
  %v552 = vand.u32 %v551, 4294901760
  %553 = vmatpush1.msra.mxu0 %v552
  %554 = vmatprep.subr.mxu0 0.0
  %v555 = vand.u32 %v42, 4294901760
  %v556 = vsub.f32 %v42, %v555
  %v557 = vand.u32 %v556, 4294901760
  %558 = vmatpush1.msra.mxu0 %v557
  %559 = vmatprep.subr.mxu0 0.0
  %560 = vmatpush1.msra.mxu0 0.0
  %561 = vmatprep.subr.mxu0 0.0
  %562 = vmatpush1.msra.mxu0 0.0
  %563 = vmatprep.subr.mxu0 0.0
  %564 = vmatpush1.msra.mxu0 0.0
  %565 = vmatprep.subr.mxu0 0.0
  %566 = vmatpush1.msra.mxu0 0.0
  %567 = vmatprep.subr.mxu0 0.0
  %568 = vmatpush1.msra.mxu0 0.0
  %569 = vmatprep.subr.mxu0 0.0
  %570 = vmatpush1.msra.mxu0 0.0
  %571 = vmatprep.subr.mxu0 0.0
  %572 = vmatpush1.msra.mxu0 0.0
  %573 = vmatprep.subr.mxu0 0.0
  %574 = vmatpush1.msra.mxu0 0.0
  %575 = vmatprep.subr.mxu0 0.0
  %576 = vmatpush1.msra.mxu0 0.0
  %577 = vmatprep.subr.mxu0 0.0
  %578 = vmatpush1.msra.mxu0 0.0
  %579 = vmatprep.subr.mxu0 0.0
  %580 = vmatpush1.msra.mxu0 0.0
  %581 = vmatprep.subr.mxu0 0.0
  %582 = vmatpush1.msra.mxu0 0.0
  %583 = vmatprep.subr.mxu0 0.0
  %584 = vmatpush1.msra.mxu0 0.0
  %585 = vmatprep.subr.mxu0 0.0
  %586 = vmatpush1.msra.mxu0 0.0
  %587 = vmatprep.subr.mxu0 0.0
  %588 = vmatpush1.msra.mxu0 0.0
  %589 = vmatprep.subr.mxu0 0.0
  %590 = vmatpush1.msra.mxu0 0.0
  %591 = vmatprep.mubr.f32.mxu0 0.0
  %v592 = vand.u32 %v26, 4294901760
  %593 = vmatmul.mubr.f32.gmra.mrb[0].mxu0 %v592
  %v594 = vpop.f32.mrb[0].mxu0
  %v595 = vadd.f32 %v476, %v594
  %v596 = vpop.f32.mrb[0].mxu0
  %597 = vdwg.mxu0
  %598 = vmatprep.subr.mxu0 0.0
  %v599 = vand.u32 %v27, 4294901760
  %600 = vmatpush1.msra.mxu0 %v599
  %601 = vmatprep.subr.mxu0 0.0
  %v602 = vand.u32 %v28, 4294901760
  %603 = vmatpush1.msra.mxu0 %v602
  %604 = vmatprep.subr.mxu0 0.0
  %v605 = vand.u32 %v29, 4294901760
  %606 = vmatpush1.msra.mxu0 %v605
  %607 = vmatprep.subr.mxu0 0.0
  %v608 = vand.u32 %v30, 4294901760
  %609 = vmatpush1.msra.mxu0 %v608
  %610 = vmatprep.subr.mxu0 0.0
  %v611 = vand.u32 %v31, 4294901760
  %612 = vmatpush1.msra.mxu0 %v611
  %613 = vmatprep.subr.mxu0 0.0
  %v614 = vand.u32 %v32, 4294901760
  %615 = vmatpush1.msra.mxu0 %v614
  %616 = vmatprep.subr.mxu0 0.0
  %v617 = vand.u32 %v33, 4294901760
  %618 = vmatpush1.msra.mxu0 %v617
  %619 = vmatprep.subr.mxu0 0.0
  %v620 = vand.u32 %v34, 4294901760
  %621 = vmatpush1.msra.mxu0 %v620
  %622 = vmatprep.subr.mxu0 0.0
  %v623 = vand.u32 %v35, 4294901760
  %624 = vmatpush1.msra.mxu0 %v623
  %625 = vmatprep.subr.mxu0 0.0
  %v626 = vand.u32 %v36, 4294901760
  %627 = vmatpush1.msra.mxu0 %v626
  %628 = vmatprep.subr.mxu0 0.0
  %v629 = vand.u32 %v37, 4294901760
  %630 = vmatpush1.msra.mxu0 %v629
  %631 = vmatprep.subr.mxu0 0.0
  %v632 = vand.u32 %v38, 4294901760
  %633 = vmatpush1.msra.mxu0 %v632
  %634 = vmatprep.subr.mxu0 0.0
  %v635 = vand.u32 %v39, 4294901760
  %636 = vmatpush1.msra.mxu0 %v635
  %637 = vmatprep.subr.mxu0 0.0
  %v638 = vand.u32 %v40, 4294901760
  %639 = vmatpush1.msra.mxu0 %v638
  %640 = vmatprep.subr.mxu0 0.0
  %v641 = vand.u32 %v41, 4294901760
  %642 = vmatpush1.msra.mxu0 %v641
  %643 = vmatprep.subr.mxu0 0.0
  %v644 = vand.u32 %v42, 4294901760
  %645 = vmatpush1.msra.mxu0 %v644
  %646 = vmatprep.subr.mxu0 0.0
  %647 = vmatpush1.msra.mxu0 0.0
  %648 = vmatprep.subr.mxu0 0.0
  %649 = vmatpush1.msra.mxu0 0.0
  %650 = vmatprep.subr.mxu0 0.0
  %651 = vmatpush1.msra.mxu0 0.0
  %652 = vmatprep.subr.mxu0 0.0
  %653 = vmatpush1.msra.mxu0 0.0
  %654 = vmatprep.subr.mxu0 0.0
  %655 = vmatpush1.msra.mxu0 0.0
  %656 = vmatprep.subr.mxu0 0.0
  %657 = vmatpush1.msra.mxu0 0.0
  %658 = vmatprep.subr.mxu0 0.0
  %659 = vmatpush1.msra.mxu0 0.0
  %660 = vmatprep.subr.mxu0 0.0
  %661 = vmatpush1.msra.mxu0 0.0
  %662 = vmatprep.subr.mxu0 0.0
  %663 = vmatpush1.msra.mxu0 0.0
  %664 = vmatprep.subr.mxu0 0.0
  %665 = vmatpush1.msra.mxu0 0.0
  %666 = vmatprep.subr.mxu0 0.0
  %667 = vmatpush1.msra.mxu0 0.0
  %668 = vmatprep.subr.mxu0 0.0
  %669 = vmatpush1.msra.mxu0 0.0
  %670 = vmatprep.subr.mxu0 0.0
  %671 = vmatpush1.msra.mxu0 0.0
  %672 = vmatprep.subr.mxu0 0.0
  %673 = vmatpush1.msra.mxu0 0.0
  %674 = vmatprep.subr.mxu0 0.0
  %675 = vmatpush1.msra.mxu0 0.0
  %676 = vmatprep.subr.mxu0 0.0
  %677 = vmatpush1.msra.mxu0 0.0
  %678 = vmatprep.mubr.f32.mxu0 0.0
  %v679 = vand.u32 %v26, 4294901760
  %680 = vmatmul.mubr.f32.gmra.mrb[0].mxu0 %v679
  %v681 = vpop.f32.mrb[0].mxu0
  %v682 = vadd.f32 %v595, %v681
  %v683 = vpop.f32.mrb[0].mxu0
  %684 = vdwg.mxu0
  %v685 = vadd.f32 %v43, %v682
  %686 = vst [vmem:[%s4] sm:$0xff] %v685
  // Predicated region
  $region22: #{_forward.3} parent=0 // pred_check
    %p687 = pneg %p17
  $region23: #{_forward.3} parent=0 // pred_check_branch
    %689 = sbr.rel (%p687) target = $region25
  $region24: #{_forward.3} parent=0 // pred_region
    %v690 = vld [vmem:[%s4] sm:$0xff]
    %v691 = vlaneseq
    %v692 = vshrl.u32 %v691, 7
    %v693 = vsub.s32 0, %v692
    %v694 = vrot.slane %v690, %v693
    %v695 = vsub.f32 %v690, %v694
    %v696 = vrot.slane %v695, 4
    %v697 = vadd.f32 %v695, %v696
    %v698 = vrot.slane %v697, 2
    %v699 = vadd.f32 %v697, %v698
    %v700 = vrot.slane %v699, 1
    %v701 = vadd.f32 %v699, %v700
    %v702 = vmul.f32 %v701, 0.125
    %v703 = vmul.f32 %v695, %v695
    %v704 = vrot.slane %v703, 4
    %v705 = vadd.f32 %v703, %v704
    %v706 = vrot.slane %v705, 2
    %v707 = vadd.f32 %v705, %v706
    %v708 = vrot.slane %v707, 1
    %v709 = vadd.f32 %v707, %v708
    %v710 = vmul.f32 %v709, 0.125
    %v711 = vmul.f32 %v702, %v702
    %v712 = vsub.f32 %v710, %v711
    %v713 = vmax.f32 %v712, 0.0
    %v714 = vadd.f32 %v702, %v690
    %v715 = vld [vmem:[%s2] sm:$0x1]
    %v716 = vadd.f32 %v713, 1e-05
    %v717 = vrsqrt.pop %v716
    %v718 = vmul.f32 %v715, %v717
    %v719 = vld [vmem:[%s3] sm:$0x1]
    %v720 = vmul.f32 %v714, %v718
    %v721 = vsub.f32 %v719, %v720
    %v723 = vlaneseq
    %v724 = vshrl.u32 %v723, 7
    %v725 = vsub.s32 0, %v724
    %v726 = vrot.slane %v718, %v725
    %v728 = vmul.f32 %v690, %v726
    %v730 = vlaneseq
    %v731 = vshrl.u32 %v730, 7
    %v732 = vsub.s32 0, %v731
    %v733 = vrot.slane %v721, %v732
    %v735 = vadd.f32 %v728, %v733
    %v736 = vmax.f32 %v735, 0.0
    %737 = vst [vmem:[%s4] sm:$0xff] %v736
  $region25: #{_forward.3} parent=0 // pred_fallthru
    _
  // Predicated region
  $region26: #{_forward.3} parent=0 // pred_check
    _
  $region27: #{_forward.3} parent=0 // pred_check_branch
    %739 = sbr.rel (0) target = $region29
  $region28: #{_forward.3} parent=0 // pred_region
    _
  $region29: #{_forward.3} parent=0 // pred_fallthru
    _
  // Predicated region
  $region30: #{_forward.3} parent=0 // pred_check
    _
  $region31: #{_forward.3} parent=0 // pred_check_branch
    %741 = sbr.rel (0) target = $region33
  $region32: #{_forward.3} parent=0 // pred_region
    _
  $region33: #{_forward.3} parent=0 // pred_fallthru
    _

// kernel: _forward.5
$region0: #{_forward.5}
  #allocation0 [shape = 'u32[]', space=smem, size = 0x4, offset = 0x4, fixed_abs, tag = 'smem constant byte address 0x4 - core index']
  #allocation1 [shape = 'u32[144,128]{1,0:T(1,128)}', space=vmem, size = 0x12000, scoped, tag = 'internal scratch']
  %s0 = inlined_call_operand.vmem [shape: f32[8,128], index: 0, kind: input, shape index: {}]
  %s1 = inlined_call_operand.vmem [shape: f32[128,128], index: 1, kind: input, shape index: {}]
  %s2 = inlined_call_operand.vmem [shape: f32[1,128], index: 2, kind: input, shape index: {}]
  %s3 = inlined_call_operand.vmem [shape: f32[1,128], index: 3, kind: input, shape index: {}]
  %s4 = inlined_call_operand.hbm [shape: f32[8,128], index: 4, kind: output, shape index: {}]
  %s5 = sld [smem:[#allocation0]]
  $region34: #{_forward.5} parent=0
    _
  %s7 = ssub.s32 1, %s5
  %s8 = scalar_select 0, %s7, %s5
  $region1: #{_forward.5} parent=0
    #allocation2 [shape = 'u8[4096]{0}', space=vmem, size = 0x1000, scoped, tag = 'output window, operand 0, single buffered']
    #allocation3 [shape = 's32[1]{0}', space=sflag, size = 0x4, scoped, tag = 'scoped memory for _forward.5']
    %9 = vsyncpa [#allocation3], 0
    // Predicated region
    $region2: #{_forward.5} parent=1 // pred_check
      _
    $region3: #{_forward.5} parent=1 // pred_check_branch
      %11 = sbr.rel (0) target = $region5
    $region4: #{_forward.5} parent=1 // pred_region
      _
    $region5: #{_forward.5} parent=1 // pred_fallthru
      _
    // Predicated region
    $region6: #{_forward.5} parent=1 // pred_check
      _
    $region7: #{_forward.5} parent=1 // pred_check_branch
      %13 = sbr.rel (0) target = $region9
    $region8: #{_forward.5} parent=1 // pred_region
      _
    $region9: #{_forward.5} parent=1 // pred_fallthru
      _
    // Predicated region
    $region10: #{_forward.5} parent=1 // pred_check
      _
    $region11: #{_forward.5} parent=1 // pred_check_branch
      %15 = sbr.rel (0) target = $region13
    $region12: #{_forward.5} parent=1 // pred_region
      _
    $region13: #{_forward.5} parent=1 // pred_fallthru
      _
    // Predicated region
    $region14: #{_forward.5} parent=1 // pred_check
      _
    $region15: #{_forward.5} parent=1 // pred_check_branch
      %17 = sbr.rel (0) target = $region17
    $region16: #{_forward.5} parent=1 // pred_region
      _
    $region17: #{_forward.5} parent=1 // pred_fallthru
      _
    %p18 = scmp.eq.s32.totalorder 0, 0
    // Predicated region
    $region18: #{_forward.5} parent=1 // pred_check
      %p19 = pneg %p18
    $region19: #{_forward.5} parent=1 // pred_check_branch
      %21 = sbr.rel (%p19) target = $region21
    $region20: #{_forward.5} parent=1 // pred_region
      %22 = vst [vmem:[#allocation2] sm:$0xff] 0.0
    $region21: #{_forward.5} parent=1 // pred_fallthru
      _
    %s23 = smul.u32 0, 128
    %s24 = sshra.s32 %s23, 7
    %s25 = sand.u32 %s23, 127
    %s26 = scalar_lea.vmem %s0, %s24
    %v27 = vld [vmem:[%s26] sm:$0xff]
    %v28 = vld [vmem:[%s1] sm:$0xff]
    %v29 = vld [vmem:[%s1 + $0x8] sm:$0xff]
    %v30 = vld [vmem:[%s1 + $0x10] sm:$0xff]
    %v31 = vld [vmem:[%s1 + $0x18] sm:$0xff]
    %v32 = vld [vmem:[%s1 + $0x20] sm:$0xff]
    %v33 = vld [vmem:[%s1 + $0x28] sm:$0xff]
    %v34 = vld [vmem:[%s1 + $0x30] sm:$0xff]
    %v35 = vld [vmem:[%s1 + $0x38] sm:$0xff]
    %v36 = vld [vmem:[%s1 + $0x40] sm:$0xff]
    %v37 = vld [vmem:[%s1 + $0x48] sm:$0xff]
    %v38 = vld [vmem:[%s1 + $0x50] sm:$0xff]
    %v39 = vld [vmem:[%s1 + $0x58] sm:$0xff]
    %v40 = vld [vmem:[%s1 + $0x60] sm:$0xff]
    %v41 = vld [vmem:[%s1 + $0x68] sm:$0xff]
    %v42 = vld [vmem:[%s1 + $0x70] sm:$0xff]
    %v43 = vld [vmem:[%s1 + $0x78] sm:$0xff]
    %v44 = vld [vmem:[#allocation2] sm:$0xff]
    %45 = vmatprep.subr.mxu0 0.0
    %v46 = vand.u32 %v28, 4294901760
    %47 = vmatpush1.msra.mxu0 %v46
    %48 = vmatprep.subr.mxu0 0.0
    %v49 = vand.u32 %v29, 4294901760
    %50 = vmatpush1.msra.mxu0 %v49
    %51 = vmatprep.subr.mxu0 0.0
    %v52 = vand.u32 %v30, 4294901760
    %53 = vmatpush1.msra.mxu0 %v52
    %54 = vmatprep.subr.mxu0 0.0
    %v55 = vand.u32 %v31, 4294901760
    %56 = vmatpush1.msra.mxu0 %v55
    %57 = vmatprep.subr.mxu0 0.0
    %v58 = vand.u32 %v32, 4294901760
    %59 = vmatpush1.msra.mxu0 %v58
    %60 = vmatprep.subr.mxu0 0.0
    %v61 = vand.u32 %v33, 4294901760
    %62 = vmatpush1.msra.mxu0 %v61
    %63 = vmatprep.subr.mxu0 0.0
    %v64 = vand.u32 %v34, 4294901760
    %65 = vmatpush1.msra.mxu0 %v64
    %66 = vmatprep.subr.mxu0 0.0
    %v67 = vand.u32 %v35, 4294901760
    %68 = vmatpush1.msra.mxu0 %v67
    %69 = vmatprep.subr.mxu0 0.0
    %v70 = vand.u32 %v36, 4294901760
    %71 = vmatpush1.msra.mxu0 %v70
    %72 = vmatprep.subr.mxu0 0.0
    %v73 = vand.u32 %v37, 4294901760
    %74 = vmatpush1.msra.mxu0 %v73
    %75 = vmatprep.subr.mxu0 0.0
    %v76 = vand.u32 %v38, 4294901760
    %77 = vmatpush1.msra.mxu0 %v76
    %78 = vmatprep.subr.mxu0 0.0
    %v79 = vand.u32 %v39, 4294901760
    %80 = vmatpush1.msra.mxu0 %v79
    %81 = vmatprep.subr.mxu0 0.0
    %v82 = vand.u32 %v40, 4294901760
    %83 = vmatpush1.msra.mxu0 %v82
    %84 = vmatprep.subr.mxu0 0.0
    %v85 = vand.u32 %v41, 4294901760
    %86 = vmatpush1.msra.mxu0 %v85
    %87 = vmatprep.subr.mxu0 0.0
    %v88 = vand.u32 %v42, 4294901760
    %89 = vmatpush1.msra.mxu0 %v88
    %90 = vmatprep.subr.mxu0 0.0
    %v91 = vand.u32 %v43, 4294901760
    %92 = vmatpush1.msra.mxu0 %v91
    %93 = vmatprep.subr.mxu0 0.0
    %94 = vmatpush1.msra.mxu0 0.0
    %95 = vmatprep.subr.mxu0 0.0
    %96 = vmatpush1.msra.mxu0 0.0
    %97 = vmatprep.subr.mxu0 0.0
    %98 = vmatpush1.msra.mxu0 0.0
    %99 = vmatprep.subr.mxu0 0.0
    %100 = vmatpush1.msra.mxu0 0.0
    %101 = vmatprep.subr.mxu0 0.0
    %102 = vmatpush1.msra.mxu0 0.0
    %103 = vmatprep.subr.mxu0 0.0
    %104 = vmatpush1.msra.mxu0 0.0
    %105 = vmatprep.subr.mxu0 0.0
    %106 = vmatpush1.msra.mxu0 0.0
    %107 = vmatprep.subr.mxu0 0.0
    %108 = vmatpush1.msra.mxu0 0.0
    %109 = vmatprep.subr.mxu0 0.0
    %110 = vmatpush1.msra.mxu0 0.0
    %111 = vmatprep.subr.mxu0 0.0
    %112 = vmatpush1.msra.mxu0 0.0
    %113 = vmatprep.subr.mxu0 0.0
    %114 = vmatpush1.msra.mxu0 0.0
    %115 = vmatprep.subr.mxu0 0.0
    %116 = vmatpush1.msra.mxu0 0.0
    %117 = vmatprep.subr.mxu0 0.0
    %118 = vmatpush1.msra.mxu0 0.0
    %119 = vmatprep.subr.mxu0 0.0
    %120 = vmatpush1.msra.mxu0 0.0
    %121 = vmatprep.subr.mxu0 0.0
    %122 = vmatpush1.msra.mxu0 0.0
    %123 = vmatprep.subr.mxu0 0.0
    %124 = vmatpush1.msra.mxu0 0.0
    %125 = vmatprep.mubr.f32.mxu0 0.0
    %v126 = vand.u32 %v27, 4294901760
    %v127 = vsub.f32 %v27, %v126
    %v128 = vand.u32 %v127, 4294901760
    %v129 = vsub.f32 %v127, %v128
    %v130 = vand.u32 %v129, 4294901760
    %131 = vmatmul.mubr.f32.gmra.mrb[0].mxu0 %v130
    %v132 = vpop.f32.mrb[0].mxu0
    %v133 = vadd.f32 0.0, %v132
    %v134 = vpop.f32.mrb[0].mxu0
    %135 = vdwg.mxu0
    %136 = vmatprep.subr.mxu0 0.0
    %v137 = vand.u32 %v28, 4294901760
    %v138 = vsub.f32 %v28, %v137
    %v139 = vand.u32 %v138, 4294901760
    %v140 = vsub.f32 %v138, %v139
    %v141 = vand.u32 %v140, 4294901760
    %142 = vmatpush1.msra.mxu0 %v141
    %143 = vmatprep.subr.mxu0 0.0
    %v144 = vand.u32 %v29, 4294901760
    %v145 = vsub.f32 %v29, %v144
    %v146 = vand.u32 %v145, 4294901760
    %v147 = vsub.f32 %v145, %v146
    %v148 = vand.u32 %v147, 4294901760
    %149 = vmatpush1.msra.mxu0 %v148
    %150 = vmatprep.subr.mxu0 0.0
    %v151 = vand.u32 %v30, 4294901760
    %v152 = vsub.f32 %v30, %v151
    %v153 = vand.u32 %v152, 4294901760
    %v154 = vsub.f32 %v152, %v153
    %v155 = vand.u32 %v154, 4294901760
    %156 = vmatpush1.msra.mxu0 %v155
    %157 = vmatprep.subr.mxu0 0.0
    %v158 = vand.u32 %v31, 4294901760
    %v159 = vsub.f32 %v31, %v158
    %v160 = vand.u32 %v159, 4294901760
    %v161 = vsub.f32 %v159, %v160
    %v162 = vand.u32 %v161, 4294901760
    %163 = vmatpush1.msra.mxu0 %v162
    %164 = vmatprep.subr.mxu0 0.0
    %v165 = vand.u32 %v32, 4294901760
    %v166 = vsub.f32 %v32, %v165
    %v167 = vand.u32 %v166, 4294901760
    %v168 = vsub.f32 %v166, %v167
    %v169 = vand.u32 %v168, 4294901760
    %170 = vmatpush1.msra.mxu0 %v169
    %171 = vmatprep.subr.mxu0 0.0
    %v172 = vand.u32 %v33, 4294901760
    %v173 = vsub.f32 %v33, %v172
    %v174 = vand.u32 %v173, 4294901760
    %v175 = vsub.f32 %v173, %v174
    %v176 = vand.u32 %v175, 4294901760
    %177 = vmatpush1.msra.mxu0 %v176
    %178 = vmatprep.subr.mxu0 0.0
    %v179 = vand.u32 %v34, 4294901760
    %v180 = vsub.f32 %v34, %v179
    %v181 = vand.u32 %v180, 4294901760
    %v182 = vsub.f32 %v180, %v181
    %v183 = vand.u32 %v182, 4294901760
    %184 = vmatpush1.msra.mxu0 %v183
    %185 = vmatprep.subr.mxu0 0.0
    %v186 = vand.u32 %v35, 4294901760
    %v187 = vsub.f32 %v35, %v186
    %v188 = vand.u32 %v187, 4294901760
    %v189 = vsub.f32 %v187, %v188
    %v190 = vand.u32 %v189, 4294901760
    %191 = vmatpush1.msra.mxu0 %v190
    %192 = vmatprep.subr.mxu0 0.0
    %v193 = vand.u32 %v36, 4294901760
    %v194 = vsub.f32 %v36, %v193
    %v195 = vand.u32 %v194, 4294901760
    %v196 = vsub.f32 %v194, %v195
    %v197 = vand.u32 %v196, 4294901760
    %198 = vmatpush1.msra.mxu0 %v197
    %199 = vmatprep.subr.mxu0 0.0
    %v200 = vand.u32 %v37, 4294901760
    %v201 = vsub.f32 %v37, %v200
    %v202 = vand.u32 %v201, 4294901760
    %v203 = vsub.f32 %v201, %v202
    %v204 = vand.u32 %v203, 4294901760
    %205 = vmatpush1.msra.mxu0 %v204
    %206 = vmatprep.subr.mxu0 0.0
    %v207 = vand.u32 %v38, 4294901760
    %v208 = vsub.f32 %v38, %v207
    %v209 = vand.u32 %v208, 4294901760
    %v210 = vsub.f32 %v208, %v209
    %v211 = vand.u32 %v210, 4294901760
    %212 = vmatpush1.msra.mxu0 %v211
    %213 = vmatprep.subr.mxu0 0.0
    %v214 = vand.u32 %v39, 4294901760
    %v215 = vsub.f32 %v39, %v214
    %v216 = vand.u32 %v215, 4294901760
    %v217 = vsub.f32 %v215, %v216
    %v218 = vand.u32 %v217, 4294901760
    %219 = vmatpush1.msra.mxu0 %v218
    %220 = vmatprep.subr.mxu0 0.0
    %v221 = vand.u32 %v40, 4294901760
    %v222 = vsub.f32 %v40, %v221
    %v223 = vand.u32 %v222, 4294901760
    %v224 = vsub.f32 %v222, %v223
    %v225 = vand.u32 %v224, 4294901760
    %226 = vmatpush1.msra.mxu0 %v225
    %227 = vmatprep.subr.mxu0 0.0
    %v228 = vand.u32 %v41, 4294901760
    %v229 = vsub.f32 %v41, %v228
    %v230 = vand.u32 %v229, 4294901760
    %v231 = vsub.f32 %v229, %v230
    %v232 = vand.u32 %v231, 4294901760
    %233 = vmatpush1.msra.mxu0 %v232
    %234 = vmatprep.subr.mxu0 0.0
    %v235 = vand.u32 %v42, 4294901760
    %v236 = vsub.f32 %v42, %v235
    %v237 = vand.u32 %v236, 4294901760
    %v238 = vsub.f32 %v236, %v237
    %v239 = vand.u32 %v238, 4294901760
    %240 = vmatpush1.msra.mxu0 %v239
    %241 = vmatprep.subr.mxu0 0.0
    %v242 = vand.u32 %v43, 4294901760
    %v243 = vsub.f32 %v43, %v242
    %v244 = vand.u32 %v243, 4294901760
    %v245 = vsub.f32 %v243, %v244
    %v246 = vand.u32 %v245, 4294901760
    %247 = vmatpush1.msra.mxu0 %v246
    %248 = vmatprep.subr.mxu0 0.0
    %249 = vmatpush1.msra.mxu0 0.0
    %250 = vmatprep.subr.mxu0 0.0
    %251 = vmatpush1.msra.mxu0 0.0
    %252 = vmatprep.subr.mxu0 0.0
    %253 = vmatpush1.msra.mxu0 0.0
    %254 = vmatprep.subr.mxu0 0.0
    %255 = vmatpush1.msra.mxu0 0.0
    %256 = vmatprep.subr.mxu0 0.0
    %257 = vmatpush1.msra.mxu0 0.0
    %258 = vmatprep.subr.mxu0 0.0
    %259 = vmatpush1.msra.mxu0 0.0
    %260 = vmatprep.subr.mxu0 0.0
    %261 = vmatpush1.msra.mxu0 0.0
    %262 = vmatprep.subr.mxu0 0.0
    %263 = vmatpush1.msra.mxu0 0.0
    %264 = vmatprep.subr.mxu0 0.0
    %265 = vmatpush1.msra.mxu0 0.0
    %266 = vmatprep.subr.mxu0 0.0
    %267 = vmatpush1.msra.mxu0 0.0
    %268 = vmatprep.subr.mxu0 0.0
    %269 = vmatpush1.msra.mxu0 0.0
    %270 = vmatprep.subr.mxu0 0.0
    %271 = vmatpush1.msra.mxu0 0.0
    %272 = vmatprep.subr.mxu0 0.0
    %273 = vmatpush1.msra.mxu0 0.0
    %274 = vmatprep.subr.mxu0 0.0
    %275 = vmatpush1.msra.mxu0 0.0
    %276 = vmatprep.subr.mxu0 0.0
    %277 = vmatpush1.msra.mxu0 0.0
    %278 = vmatprep.subr.mxu0 0.0
    %279 = vmatpush1.msra.mxu0 0.0
    %280 = vmatprep.mubr.f32.mxu0 0.0
    %v281 = vand.u32 %v27, 4294901760
    %282 = vmatmul.mubr.f32.gmra.mrb[0].mxu0 %v281
    %v283 = vpop.f32.mrb[0].mxu0
    %v284 = vadd.f32 %v133, %v283
    %v285 = vpop.f32.mrb[0].mxu0
    %286 = vdwg.mxu0
    %287 = vmatprep.subr.mxu0 0.0
    %v288 = vand.u32 %v28, 4294901760
    %v289 = vsub.f32 %v28, %v288
    %290 = vmatpush1.msra.mxu0 %v289
    %291 = vmatprep.subr.mxu0 0.0
    %v292 = vand.u32 %v29, 4294901760
    %v293 = vsub.f32 %v29, %v292
    %294 = vmatpush1.msra.mxu0 %v293
    %295 = vmatprep.subr.mxu0 0.0
    %v296 = vand.u32 %v30, 4294901760
    %v297 = vsub.f32 %v30, %v296
    %298 = vmatpush1.msra.mxu0 %v297
    %299 = vmatprep.subr.mxu0 0.0
    %v300 = vand.u32 %v31, 4294901760
    %v301 = vsub.f32 %v31, %v300
    %302 = vmatpush1.msra.mxu0 %v301
    %303 = vmatprep.subr.mxu0 0.0
    %v304 = vand.u32 %v32, 4294901760
    %v305 = vsub.f32 %v32, %v304
    %306 = vmatpush1.msra.mxu0 %v305
    %307 = vmatprep.subr.mxu0 0.0
    %v308 = vand.u32 %v33, 4294901760
    %v309 = vsub.f32 %v33, %v308
    %310 = vmatpush1.msra.mxu0 %v309
    %311 = vmatprep.subr.mxu0 0.0
    %v312 = vand.u32 %v34, 4294901760
    %v313 = vsub.f32 %v34, %v312
    %314 = vmatpush1.msra.mxu0 %v313
    %315 = vmatprep.subr.mxu0 0.0
    %v316 = vand.u32 %v35, 4294901760
    %v317 = vsub.f32 %v35, %v316
    %318 = vmatpush1.msra.mxu0 %v317
    %319 = vmatprep.subr.mxu0 0.0
    %v320 = vand.u32 %v36, 4294901760
    %v321 = vsub.f32 %v36, %v320
    %322 = vmatpush1.msra.mxu0 %v321
    %323 = vmatprep.subr.mxu0 0.0
    %v324 = vand.u32 %v37, 4294901760
    %v325 = vsub.f32 %v37, %v324
    %326 = vmatpush1.msra.mxu0 %v325
    %327 = vmatprep.subr.mxu0 0.0
    %v328 = vand.u32 %v38, 4294901760
    %v329 = vsub.f32 %v38, %v328
    %330 = vmatpush1.msra.mxu0 %v329
    %331 = vmatprep.subr.mxu0 0.0
    %v332 = vand.u32 %v39, 4294901760
    %v333 = vsub.f32 %v39, %v332
    %334 = vmatpush1.msra.mxu0 %v333
    %335 = vmatprep.subr.mxu0 0.0
    %v336 = vand.u32 %v40, 4294901760
    %v337 = vsub.f32 %v40, %v336
    %338 = vmatpush1.msra.mxu0 %v337
    %339 = vmatprep.subr.mxu0 0.0
    %v340 = vand.u32 %v41, 4294901760
    %v341 = vsub.f32 %v41, %v340
    %342 = vmatpush1.msra.mxu0 %v341
    %343 = vmatprep.subr.mxu0 0.0
    %v344 = vand.u32 %v42, 4294901760
    %v345 = vsub.f32 %v42, %v344
    %346 = vmatpush1.msra.mxu0 %v345
    %347 = vmatprep.subr.mxu0 0.0
    %v348 = vand.u32 %v43, 4294901760
    %v349 = vsub.f32 %v43, %v348
    %350 = vmatpush1.msra.mxu0 %v349
    %351 = vmatprep.subr.mxu0 0.0
    %352 = vmatpush1.msra.mxu0 0.0
    %353 = vmatprep.subr.mxu0 0.0
    %354 = vmatpush1.msra.mxu0 0.0
    %355 = vmatprep.subr.mxu0 0.0
    %356 = vmatpush1.msra.mxu0 0.0
    %357 = vmatprep.subr.mxu0 0.0
    %358 = vmatpush1.msra.mxu0 0.0
    %359 = vmatprep.subr.mxu0 0.0
    %360 = vmatpush1.msra.mxu0 0.0
    %361 = vmatprep.subr.mxu0 0.0
    %362 = vmatpush1.msra.mxu0 0.0
    %363 = vmatprep.subr.mxu0 0.0
    %364 = vmatpush1.msra.mxu0 0.0
    %365 = vmatprep.subr.mxu0 0.0
    %366 = vmatpush1.msra.mxu0 0.0
    %367 = vmatprep.subr.mxu0 0.0
    %368 = vmatpush1.msra.mxu0 0.0
    %369 = vmatprep.subr.mxu0 0.0
    %370 = vmatpush1.msra.mxu0 0.0
    %371 = vmatprep.subr.mxu0 0.0
    %372 = vmatpush1.msra.mxu0 0.0
    %373 = vmatprep.subr.mxu0 0.0
    %374 = vmatpush1.msra.mxu0 0.0
    %375 = vmatprep.subr.mxu0 0.0
    %376 = vmatpush1.msra.mxu0 0.0
    %377 = vmatprep.subr.mxu0 0.0
    %378 = vmatpush1.msra.mxu0 0.0
    %379 = vmatprep.subr.mxu0 0.0
    %380 = vmatpush1.msra.mxu0 0.0
    %381 = vmatprep.subr.mxu0 0.0
    %382 = vmatpush1.msra.mxu0 0.0
    %383 = vmatprep.mubr.f32.mxu0 0.0
    %v384 = vand.u32 %v27, 4294901760
    %v385 = vsub.f32 %v27, %v384
    %386 = vmatmul.mubr.f32.gmra.mrb[0].mxu0 %v385
    %v387 = vpop.f32.mrb[0].mxu0
    %v388 = vadd.f32 %v284, %v387
    %v389 = vpop.f32.mrb[0].mxu0
    %390 = vdwg.mxu0
    %391 = vmatprep.subr.mxu0 0.0
    %v392 = vand.u32 %v28, 4294901760
    %393 = vmatpush1.msra.mxu0 %v392
    %394 = vmatprep.subr.mxu0 0.0
    %v395 = vand.u32 %v29, 4294901760
    %396 = vmatpush1.msra.mxu0 %v395
    %397 = vmatprep.subr.mxu0 0.0
    %v398 = vand.u32 %v30, 4294901760
    %399 = vmatpush1.msra.mxu0 %v398
    %400 = vmatprep.subr.mxu0 0.0
    %v401 = vand.u32 %v31, 4294901760
    %402 = vmatpush1.msra.mxu0 %v401
    %403 = vmatprep.subr.mxu0 0.0
    %v404 = vand.u32 %v32, 4294901760
    %405 = vmatpush1.msra.mxu0 %v404
    %406 = vmatprep.subr.mxu0 0.0
    %v407 = vand.u32 %v33, 4294901760
    %408 = vmatpush1.msra.mxu0 %v407
    %409 = vmatprep.subr.mxu0 0.0
    %v410 = vand.u32 %v34, 4294901760
    %411 = vmatpush1.msra.mxu0 %v410
    %412 = vmatprep.subr.mxu0 0.0
    %v413 = vand.u32 %v35, 4294901760
    %414 = vmatpush1.msra.mxu0 %v413
    %415 = vmatprep.subr.mxu0 0.0
    %v416 = vand.u32 %v36, 4294901760
    %417 = vmatpush1.msra.mxu0 %v416
    %418 = vmatprep.subr.mxu0 0.0
    %v419 = vand.u32 %v37, 4294901760
    %420 = vmatpush1.msra.mxu0 %v419
    %421 = vmatprep.subr.mxu0 0.0
    %v422 = vand.u32 %v38, 4294901760
    %423 = vmatpush1.msra.mxu0 %v422
    %424 = vmatprep.subr.mxu0 0.0
    %v425 = vand.u32 %v39, 4294901760
    %426 = vmatpush1.msra.mxu0 %v425
    %427 = vmatprep.subr.mxu0 0.0
    %v428 = vand.u32 %v40, 4294901760
    %429 = vmatpush1.msra.mxu0 %v428
    %430 = vmatprep.subr.mxu0 0.0
    %v431 = vand.u32 %v41, 4294901760
    %432 = vmatpush1.msra.mxu0 %v431
    %433 = vmatprep.subr.mxu0 0.0
    %v434 = vand.u32 %v42, 4294901760
    %435 = vmatpush1.msra.mxu0 %v434
    %436 = vmatprep.subr.mxu0 0.0
    %v437 = vand.u32 %v43, 4294901760
    %438 = vmatpush1.msra.mxu0 %v437
    %439 = vmatprep.subr.mxu0 0.0
    %440 = vmatpush1.msra.mxu0 0.0
    %441 = vmatprep.subr.mxu0 0.0
    %442 = vmatpush1.msra.mxu0 0.0
    %443 = vmatprep.subr.mxu0 0.0
    %444 = vmatpush1.msra.mxu0 0.0
    %445 = vmatprep.subr.mxu0 0.0
    %446 = vmatpush1.msra.mxu0 0.0
    %447 = vmatprep.subr.mxu0 0.0
    %448 = vmatpush1.msra.mxu0 0.0
    %449 = vmatprep.subr.mxu0 0.0
    %450 = vmatpush1.msra.mxu0 0.0
    %451 = vmatprep.subr.mxu0 0.0
    %452 = vmatpush1.msra.mxu0 0.0
    %453 = vmatprep.subr.mxu0 0.0
    %454 = vmatpush1.msra.mxu0 0.0
    %455 = vmatprep.subr.mxu0 0.0
    %456 = vmatpush1.msra.mxu0 0.0
    %457 = vmatprep.subr.mxu0 0.0
    %458 = vmatpush1.msra.mxu0 0.0
    %459 = vmatprep.subr.mxu0 0.0
    %460 = vmatpush1.msra.mxu0 0.0
    %461 = vmatprep.subr.mxu0 0.0
    %462 = vmatpush1.msra.mxu0 0.0
    %463 = vmatprep.subr.mxu0 0.0
    %464 = vmatpush1.msra.mxu0 0.0
    %465 = vmatprep.subr.mxu0 0.0
    %466 = vmatpush1.msra.mxu0 0.0
    %467 = vmatprep.subr.mxu0 0.0
    %468 = vmatpush1.msra.mxu0 0.0
    %469 = vmatprep.subr.mxu0 0.0
    %470 = vmatpush1.msra.mxu0 0.0
    %471 = vmatprep.mubr.f32.mxu0 0.0
    %v472 = vand.u32 %v27, 4294901760
    %v473 = vsub.f32 %v27, %v472
    %v474 = vand.u32 %v473, 4294901760
    %475 = vmatmul.mubr.f32.gmra.mrb[0].mxu0 %v474
    %v476 = vpop.f32.mrb[0].mxu0
    %v477 = vadd.f32 %v388, %v476
    %v478 = vpop.f32.mrb[0].mxu0
    %479 = vdwg.mxu0
    %480 = vmatprep.subr.mxu0 0.0
    %v481 = vand.u32 %v28, 4294901760
    %v482 = vsub.f32 %v28, %v481
    %v483 = vand.u32 %v482, 4294901760
    %484 = vmatpush1.msra.mxu0 %v483
    %485 = vmatprep.subr.mxu0 0.0
    %v486 = vand.u32 %v29, 4294901760
    %v487 = vsub.f32 %v29, %v486
    %v488 = vand.u32 %v487, 4294901760
    %489 = vmatpush1.msra.mxu0 %v488
    %490 = vmatprep.subr.mxu0 0.0
    %v491 = vand.u32 %v30, 4294901760
    %v492 = vsub.f32 %v30, %v491
    %v493 = vand.u32 %v492, 4294901760
    %494 = vmatpush1.msra.mxu0 %v493
    %495 = vmatprep.subr.mxu0 0.0
    %v496 = vand.u32 %v31, 4294901760
    %v497 = vsub.f32 %v31, %v496
    %v498 = vand.u32 %v497, 4294901760
    %499 = vmatpush1.msra.mxu0 %v498
    %500 = vmatprep.subr.mxu0 0.0
    %v501 = vand.u32 %v32, 4294901760
    %v502 = vsub.f32 %v32, %v501
    %v503 = vand.u32 %v502, 4294901760
    %504 = vmatpush1.msra.mxu0 %v503
    %505 = vmatprep.subr.mxu0 0.0
    %v506 = vand.u32 %v33, 4294901760
    %v507 = vsub.f32 %v33, %v506
    %v508 = vand.u32 %v507, 4294901760
    %509 = vmatpush1.msra.mxu0 %v508
    %510 = vmatprep.subr.mxu0 0.0
    %v511 = vand.u32 %v34, 4294901760
    %v512 = vsub.f32 %v34, %v511
    %v513 = vand.u32 %v512, 4294901760
    %514 = vmatpush1.msra.mxu0 %v513
    %515 = vmatprep.subr.mxu0 0.0
    %v516 = vand.u32 %v35, 4294901760
    %v517 = vsub.f32 %v35, %v516
    %v518 = vand.u32 %v517, 4294901760
    %519 = vmatpush1.msra.mxu0 %v518
    %520 = vmatprep.subr.mxu0 0.0
    %v521 = vand.u32 %v36, 4294901760
    %v522 = vsub.f32 %v36, %v521
    %v523 = vand.u32 %v522, 4294901760
    %524 = vmatpush1.msra.mxu0 %v523
    %525 = vmatprep.subr.mxu0 0.0
    %v526 = vand.u32 %v37, 4294901760
    %v527 = vsub.f32 %v37, %v526
    %v528 = vand.u32 %v527, 4294901760
    %529 = vmatpush1.msra.mxu0 %v528
    %530 = vmatprep.subr.mxu0 0.0
    %v531 = vand.u32 %v38, 4294901760
    %v532 = vsub.f32 %v38, %v531
    %v533 = vand.u32 %v532, 4294901760
    %534 = vmatpush1.msra.mxu0 %v533
    %535 = vmatprep.subr.mxu0 0.0
    %v536 = vand.u32 %v39, 4294901760
    %v537 = vsub.f32 %v39, %v536
    %v538 = vand.u32 %v537, 4294901760
    %539 = vmatpush1.msra.mxu0 %v538
    %540 = vmatprep.subr.mxu0 0.0
    %v541 = vand.u32 %v40, 4294901760
    %v542 = vsub.f32 %v40, %v541
    %v543 = vand.u32 %v542, 4294901760
    %544 = vmatpush1.msra.mxu0 %v543
    %545 = vmatprep.subr.mxu0 0.0
    %v546 = vand.u32 %v41, 4294901760
    %v547 = vsub.f32 %v41, %v546
    %v548 = vand.u32 %v547, 4294901760
    %549 = vmatpush1.msra.mxu0 %v548
    %550 = vmatprep.subr.mxu0 0.0
    %v551 = vand.u32 %v42, 4294901760
    %v552 = vsub.f32 %v42, %v551
    %v553 = vand.u32 %v552, 4294901760
    %554 = vmatpush1.msra.mxu0 %v553
    %555 = vmatprep.subr.mxu0 0.0
    %v556 = vand.u32 %v43, 4294901760
    %v557 = vsub.f32 %v43, %v556
    %v558 = vand.u32 %v557, 4294901760
    %559 = vmatpush1.msra.mxu0 %v558
    %560 = vmatprep.subr.mxu0 0.0
    %561 = vmatpush1.msra.mxu0 0.0
    %562 = vmatprep.subr.mxu0 0.0
    %563 = vmatpush1.msra.mxu0 0.0
    %564 = vmatprep.subr.mxu0 0.0
    %565 = vmatpush1.msra.mxu0 0.0
    %566 = vmatprep.subr.mxu0 0.0
    %567 = vmatpush1.msra.mxu0 0.0
    %568 = vmatprep.subr.mxu0 0.0
    %569 = vmatpush1.msra.mxu0 0.0
    %570 = vmatprep.subr.mxu0 0.0
    %571 = vmatpush1.msra.mxu0 0.0
    %572 = vmatprep.subr.mxu0 0.0
    %573 = vmatpush1.msra.mxu0 0.0
    %574 = vmatprep.subr.mxu0 0.0
    %575 = vmatpush1.msra.mxu0 0.0
    %576 = vmatprep.subr.mxu0 0.0
    %577 = vmatpush1.msra.mxu0 0.0
    %578 = vmatprep.subr.mxu0 0.0
    %579 = vmatpush1.msra.mxu0 0.0
    %580 = vmatprep.subr.mxu0 0.0
    %581 = vmatpush1.msra.mxu0 0.0
    %582 = vmatprep.subr.mxu0 0.0
    %583 = vmatpush1.msra.mxu0 0.0
    %584 = vmatprep.subr.mxu0 0.0
    %585 = vmatpush1.msra.mxu0 0.0
    %586 = vmatprep.subr.mxu0 0.0
    %587 = vmatpush1.msra.mxu0 0.0
    %588 = vmatprep.subr.mxu0 0.0
    %589 = vmatpush1.msra.mxu0 0.0
    %590 = vmatprep.subr.mxu0 0.0
    %591 = vmatpush1.msra.mxu0 0.0
    %592 = vmatprep.mubr.f32.mxu0 0.0
    %v593 = vand.u32 %v27, 4294901760
    %594 = vmatmul.mubr.f32.gmra.mrb[0].mxu0 %v593
    %v595 = vpop.f32.mrb[0].mxu0
    %v596 = vadd.f32 %v477, %v595
    %v597 = vpop.f32.mrb[0].mxu0
    %598 = vdwg.mxu0
    %599 = vmatprep.subr.mxu0 0.0
    %v600 = vand.u32 %v28, 4294901760
    %601 = vmatpush1.msra.mxu0 %v600
    %602 = vmatprep.subr.mxu0 0.0
    %v603 = vand.u32 %v29, 4294901760
    %604 = vmatpush1.msra.mxu0 %v603
    %605 = vmatprep.subr.mxu0 0.0
    %v606 = vand.u32 %v30, 4294901760
    %607 = vmatpush1.msra.mxu0 %v606
    %608 = vmatprep.subr.mxu0 0.0
    %v609 = vand.u32 %v31, 4294901760
    %610 = vmatpush1.msra.mxu0 %v609
    %611 = vmatprep.subr.mxu0 0.0
    %v612 = vand.u32 %v32, 4294901760
    %613 = vmatpush1.msra.mxu0 %v612
    %614 = vmatprep.subr.mxu0 0.0
    %v615 = vand.u32 %v33, 4294901760
    %616 = vmatpush1.msra.mxu0 %v615
    %617 = vmatprep.subr.mxu0 0.0
    %v618 = vand.u32 %v34, 4294901760
    %619 = vmatpush1.msra.mxu0 %v618
    %620 = vmatprep.subr.mxu0 0.0
    %v621 = vand.u32 %v35, 4294901760
    %622 = vmatpush1.msra.mxu0 %v621
    %623 = vmatprep.subr.mxu0 0.0
    %v624 = vand.u32 %v36, 4294901760
    %625 = vmatpush1.msra.mxu0 %v624
    %626 = vmatprep.subr.mxu0 0.0
    %v627 = vand.u32 %v37, 4294901760
    %628 = vmatpush1.msra.mxu0 %v627
    %629 = vmatprep.subr.mxu0 0.0
    %v630 = vand.u32 %v38, 4294901760
    %631 = vmatpush1.msra.mxu0 %v630
    %632 = vmatprep.subr.mxu0 0.0
    %v633 = vand.u32 %v39, 4294901760
    %634 = vmatpush1.msra.mxu0 %v633
    %635 = vmatprep.subr.mxu0 0.0
    %v636 = vand.u32 %v40, 4294901760
    %637 = vmatpush1.msra.mxu0 %v636
    %638 = vmatprep.subr.mxu0 0.0
    %v639 = vand.u32 %v41, 4294901760
    %640 = vmatpush1.msra.mxu0 %v639
    %641 = vmatprep.subr.mxu0 0.0
    %v642 = vand.u32 %v42, 4294901760
    %643 = vmatpush1.msra.mxu0 %v642
    %644 = vmatprep.subr.mxu0 0.0
    %v645 = vand.u32 %v43, 4294901760
    %646 = vmatpush1.msra.mxu0 %v645
    %647 = vmatprep.subr.mxu0 0.0
    %648 = vmatpush1.msra.mxu0 0.0
    %649 = vmatprep.subr.mxu0 0.0
    %650 = vmatpush1.msra.mxu0 0.0
    %651 = vmatprep.subr.mxu0 0.0
    %652 = vmatpush1.msra.mxu0 0.0
    %653 = vmatprep.subr.mxu0 0.0
    %654 = vmatpush1.msra.mxu0 0.0
    %655 = vmatprep.subr.mxu0 0.0
    %656 = vmatpush1.msra.mxu0 0.0
    %657 = vmatprep.subr.mxu0 0.0
    %658 = vmatpush1.msra.mxu0 0.0
    %659 = vmatprep.subr.mxu0 0.0
    %660 = vmatpush1.msra.mxu0 0.0
    %661 = vmatprep.subr.mxu0 0.0
    %662 = vmatpush1.msra.mxu0 0.0
    %663 = vmatprep.subr.mxu0 0.0
    %664 = vmatpush1.msra.mxu0 0.0
    %665 = vmatprep.subr.mxu0 0.0
    %666 = vmatpush1.msra.mxu0 0.0
    %667 = vmatprep.subr.mxu0 0.0
    %668 = vmatpush1.msra.mxu0 0.0
    %669 = vmatprep.subr.mxu0 0.0
    %670 = vmatpush1.msra.mxu0 0.0
    %671 = vmatprep.subr.mxu0 0.0
    %672 = vmatpush1.msra.mxu0 0.0
    %673 = vmatprep.subr.mxu0 0.0
    %674 = vmatpush1.msra.mxu0 0.0
    %675 = vmatprep.subr.mxu0 0.0
    %676 = vmatpush1.msra.mxu0 0.0
    %677 = vmatprep.subr.mxu0 0.0
    %678 = vmatpush1.msra.mxu0 0.0
    %679 = vmatprep.mubr.f32.mxu0 0.0
    %v680 = vand.u32 %v27, 4294901760
    %681 = vmatmul.mubr.f32.gmra.mrb[0].mxu0 %v680
    %v682 = vpop.f32.mrb[0].mxu0
    %v683 = vadd.f32 %v596, %v682
    %v684 = vpop.f32.mrb[0].mxu0
    %685 = vdwg.mxu0
    %v686 = vadd.f32 %v44, %v683
    %687 = vst [vmem:[#allocation2] sm:$0xff] %v686
    // Predicated region
    $region22: #{_forward.5} parent=1 // pred_check
      %p688 = pneg %p18
    $region23: #{_forward.5} parent=1 // pred_check_branch
      %690 = sbr.rel (%p688) target = $region25
    $region24: #{_forward.5} parent=1 // pred_region
      %v691 = vld [vmem:[#allocation2] sm:$0xff]
      %v692 = vlaneseq
      %v693 = vshrl.u32 %v692, 7
      %v694 = vsub.s32 0, %v693
      %v695 = vrot.slane %v691, %v694
      %v696 = vsub.f32 %v691, %v695
      %v697 = vrot.slane %v696, 4
      %v698 = vadd.f32 %v696, %v697
      %v699 = vrot.slane %v698, 2
      %v700 = vadd.f32 %v698, %v699
      %v701 = vrot.slane %v700, 1
      %v702 = vadd.f32 %v700, %v701
      %v703 = vmul.f32 %v702, 0.125
      %v704 = vmul.f32 %v696, %v696
      %v705 = vrot.slane %v704, 4
      %v706 = vadd.f32 %v704, %v705
      %v707 = vrot.slane %v706, 2
      %v708 = vadd.f32 %v706, %v707
      %v709 = vrot.slane %v708, 1
      %v710 = vadd.f32 %v708, %v709
      %v711 = vmul.f32 %v710, 0.125
      %v712 = vmul.f32 %v703, %v703
      %v713 = vsub.f32 %v711, %v712
      %v714 = vmax.f32 %v713, 0.0
      %v715 = vadd.f32 %v703, %v691
      %v716 = vld [vmem:[%s2] sm:$0x1]
      %v717 = vadd.f32 %v714, 1e-05
      %v718 = vrsqrt.pop %v717
      %v719 = vmul.f32 %v716, %v718
      %v720 = vld [vmem:[%s3] sm:$0x1]
      %v721 = vmul.f32 %v715, %v719
      %v722 = vsub.f32 %v720, %v721
      %v724 = vlaneseq
      %v725 = vshrl.u32 %v724, 7
      %v726 = vsub.s32 0, %v725
      %v727 = vrot.slane %v719, %v726
      %v729 = vmul.f32 %v691, %v727
      %v731 = vlaneseq
      %v732 = vshrl.u32 %v731, 7
      %v733 = vsub.s32 0, %v732
      %v734 = vrot.slane %v722, %v733
      %v736 = vadd.f32 %v729, %v734
      %737 = vst [vmem:[#allocation2] sm:$0xff] %v736
    $region25: #{_forward.5} parent=1 // pred_fallthru
      _
    // Predicated region
    $region26: #{_forward.5} parent=1 // pred_check
      _
    $region27: #{_forward.5} parent=1 // pred_check_branch
      %739 = sbr.rel (0) target = $region29
    $region28: #{_forward.5} parent=1 // pred_region
      %s741 = ssub.s32 128, 128
      %742 = vsyncadd [#allocation3], %s741
      %s744 = sshll.u32 [#allocation2], 4
      %s745 = int_to_ptr.vmem [resolvable:$true] %s744
      %747 = dma.vmem_to_hbm [thread:$0]  %s745, 128, %s4, [#allocation3]
    $region29: #{_forward.5} parent=1 // pred_fallthru
      _
    // Predicated region
    $region30: #{_forward.5} parent=1 // pred_check
      _
    $region31: #{_forward.5} parent=1 // pred_check_branch
      %749 = sbr.rel (0) target = $region33
    $region32: #{_forward.5} parent=1 // pred_region
      %750 = dma.done [#allocation3], 128
    $region33: #{_forward.5} parent=1 // pred_fallthru
      _
    %751 = vsyncpa [#allocation3], 1

</llo_original>
